<compile_context>
chip_gen: v7x
topology: tpu7x:2x2x1
jax: 0.10.0
libtpu: 0.0.40
codegen_flags: <defaults>
</compile_context>

<pallas_src>
import functools

import jax
import jax.numpy as jnp
from jax import lax
from jax.experimental import pallas as pl
from jax.experimental.pallas import tpu as pltpu


def _make_kernel(C_in, C_out, H1, W_mid, W2, Wp, k, d, pad):
    """Build the fused two-stage kernel with all sizes baked in (static unroll)."""
    cpg = C_out // C_in          # output channels per group
    f32 = jnp.float32

    def kernel(x_ref, w1_ref, b1_ref, w2_ref, b2_ref, o_ref, z1_ref):
        # x_ref : (1, C_in, Hp, Wp)   input, zero-padded in H and W by the wrapper
        # w1_ref: (C_in, k)  SMEM     vertical depthwise weights
        # b1_ref: (C_in,)    SMEM
        # w2_ref: (C_out, k) SMEM     horizontal grouped weights
        # b2_ref: (C_out,)   SMEM
        # o_ref : (1, C_out, H1, W2)
        # z1_ref: (C_in, H1, Wp) VMEM scratch = zero-padded, bias-free stage-1 output

        # ---- Stage 1: (k,1) depthwise dilated conv along H (bias-free, VPU MACs). ----
        # Because x is zero-padded in W too, z1's border columns are exactly zero,
        # i.e. z1 == zero-pad_W(conv1_nobias(x)).
        for c in range(C_in):
            acc = x_ref[0, c, 0:H1, :].astype(f32) * w1_ref[c, 0]
            for i in range(1, k):
                acc = acc + x_ref[0, c, i * d:i * d + H1, :].astype(f32) * w1_ref[c, i]
            z1_ref[c] = acc

        # Column index over the output width; used to mark where the first conv's
        # bias b1 is present in y1 = conv1(x) + b1 (it is absent in the zero padding).
        col = lax.broadcasted_iota(jnp.int32, (H1, W2), 1)

        # ---- Stage 2: (1,k) grouped dilated conv along W (groups = C_in). ----
        for g in range(C_in):
            b1_g = b1_ref[g]
            wins = []
            for j in range(k):
                raw = z1_ref[g, :, j * d:j * d + W2]               # shifted window (lane offset)
                valid = jnp.logical_and(col + j * d >= pad, col + j * d < pad + W_mid)
                wins.append(jnp.where(valid, raw + b1_g, raw))      # re-inject b1 on valid cols
            for oc in range(cpg):
                o = g * cpg + oc
                acc = wins[0] * w2_ref[o, 0] + b2_ref[o]
                for j in range(1, k):
                    acc = acc + wins[j] * w2_ref[o, j]
                o_ref[0, o] = acc.astype(o_ref.dtype)

    return kernel


def channel_wise_dilated_conv(x, w1, b1, w2, b2, *, kSize, stride=1, d=1):
    """Forward pass of ChannelWiseDilatedConv.

    x : (N, nIn, H, W)          NCHW
    w1: (nIn, 1, kSize, 1), b1: (nIn,)      -- first (vertical, depthwise) conv
    w2: (nOut, 1, 1, kSize), b2: (nOut,)    -- second (horizontal, groups=nIn) conv
    """
    if stride != 1:
        # TODO(synk): stride > 1 (both convs strided) not implemented; module default is stride=1.
        raise NotImplementedError("channel_wise_dilated_conv: only stride=1 is supported")

    N, C_in, H, W = x.shape
    C_out = w2.shape[0]
    assert C_out % C_in == 0, "nOut must be divisible by nIn (groups=nIn)"

    pad = (kSize - 1) // 2 * d
    H1 = H + 2 * pad - d * (kSize - 1)       # stage-1 output height (== H for odd kSize)
    W_mid = W                                # stage-1 output width (kernel 1 along W)
    W2 = W + 2 * pad - d * (kSize - 1)       # stage-2 output width (== W for odd kSize)
    Hp = H + 2 * pad
    Wp = W + 2 * pad

    # Only wrapper glue: zero-pad the input in H (for conv1) and W (pre-padding for conv2).
    xp = jnp.pad(x, ((0, 0), (0, 0), (pad, pad), (pad, pad)))

    w1_mat = w1.reshape(C_in, kSize).astype(jnp.float32)
    w2_mat = w2.reshape(C_out, kSize).astype(jnp.float32)
    b1_v = b1.astype(jnp.float32)
    b2_v = b2.astype(jnp.float32)

    kernel = _make_kernel(C_in, C_out, H1, W_mid, W2, Wp, kSize, d, pad)

    out = pl.pallas_call(
        kernel,
        out_shape=jax.ShapeDtypeStruct((N, C_out, H1, W2), x.dtype),
        grid_spec=pltpu.PrefetchScalarGridSpec(
            num_scalar_prefetch=0,
            grid=(N,),
            in_specs=[
                pl.BlockSpec((1, C_in, Hp, Wp), lambda n: (n, 0, 0, 0)),
                pl.BlockSpec(memory_space=pltpu.MemorySpace.SMEM),   # w1 (C_in, k)
                pl.BlockSpec(memory_space=pltpu.MemorySpace.SMEM),   # b1 (C_in,)
                pl.BlockSpec(memory_space=pltpu.MemorySpace.SMEM),   # w2 (C_out, k)
                pl.BlockSpec(memory_space=pltpu.MemorySpace.SMEM),   # b2 (C_out,)
            ],
            out_specs=pl.BlockSpec((1, C_out, H1, W2), lambda n: (n, 0, 0, 0)),
            scratch_shapes=[pltpu.VMEM((C_in, H1, Wp), jnp.float32)],
        ),
        compiler_params=pltpu.CompilerParams(
            dimension_semantics=("parallel",),
        ),
    )(xp, w1_mat, b1_v, w2_mat, b2_v)
    return out


def _reference_forward(x, w1, b1, w2, b2, *, kSize, stride, d):
    """Pure-JAX reference mirroring the two nn.Conv2d layers exactly."""
    C_in = x.shape[1]
    pad = (kSize - 1) // 2 * d
    dn = ("NCHW", "OIHW", "NCHW")
    y1 = lax.conv_general_dilated(
        x, w1, window_strides=(stride, stride),
        padding=((pad, pad), (0, 0)), rhs_dilation=(d, d),
        dimension_numbers=dn, feature_group_count=C_in,
        precision=lax.Precision.HIGHEST,
    ) + b1[None, :, None, None]
    y2 = lax.conv_general_dilated(
        y1, w2, window_strides=(stride, stride),
        padding=((0, 0), (pad, pad)), rhs_dilation=(d, d),
        dimension_numbers=dn, feature_group_count=C_in,
        precision=lax.Precision.HIGHEST,
    ) + b2[None, :, None, None]
    return y2


if __name__ == "__main__":
    # Module config: ChannelWiseDilatedConv(nIn_ori=4, nOut_ori=8, kSize=3, stride=1, d=2)
    nIn, nOut, kSize, stride, d = 4, 8, 3, 1, 2
    N, H, W = 2, 16, 16

    key = jax.random.PRNGKey(0)
    kx, k1, kb1, k2, kb2 = jax.random.split(key, 5)

    x = jax.random.normal(kx, (N, nIn, H, W), dtype=jnp.float32)
    w1 = 0.3 * jax.random.normal(k1, (nIn, 1, kSize, 1), dtype=jnp.float32)   # conv1 weight
    b1 = 0.1 * jax.random.normal(kb1, (nIn,), dtype=jnp.float32)              # conv1 bias
    w2 = 0.3 * jax.random.normal(k2, (nOut, 1, 1, kSize), dtype=jnp.float32)  # conv2 weight
    b2 = 0.1 * jax.random.normal(kb2, (nOut,), dtype=jnp.float32)             # conv2 bias

    out = channel_wise_dilated_conv(x, w1, b1, w2, b2, kSize=kSize, stride=stride, d=d)
    out = jax.block_until_ready(out)
    assert out.shape == (N, nOut, H, W), out.shape

    ref = _reference_forward(x, w1, b1, w2, b2, kSize=kSize, stride=stride, d=d)
    err = float(jnp.max(jnp.abs(out - ref)))
    assert jnp.allclose(out, ref, atol=1e-3, rtol=1e-3), f"max abs err = {err}"

    print("KERNEL_OK")
</pallas_src>

<mosaic_0001>
module attributes {stable_mosaic.version = 11 : i64} {
  func.func @kernel(%arg0: i32, %arg1: memref<1x4x20x20xf32, #tpu.memory_space<vmem>>, %arg2: memref<4x3xf32, #tpu.memory_space<smem>>, %arg3: memref<4xf32, #tpu.memory_space<smem>>, %arg4: memref<8x3xf32, #tpu.memory_space<smem>>, %arg5: memref<8xf32, #tpu.memory_space<smem>>, %arg6: memref<1x8x16x16xf32, #tpu.memory_space<vmem>>, %arg7: memref<4x16x20xf32, #tpu.memory_space<vmem>>) attributes {dimension_semantics = [#tpu.dimension_semantics<parallel>], iteration_bounds = array<i64: 2>, scalar_prefetch = 0 : i64, scratch_operands = 1 : i64, tpu.core_type = #tpu.core_type<tc>, window_params = [{transform_indices = @transform_0, window_bounds = array<i64: 1, 4, 20, 20>}, {transform_indices = @transform_1, window_bounds = array<i64: 4, 3>}, {transform_indices = @transform_2, window_bounds = array<i64: 4>}, {transform_indices = @transform_3, window_bounds = array<i64: 8, 3>}, {transform_indices = @transform_4, window_bounds = array<i64: 8>}, {transform_indices = @transform_5, window_bounds = array<i64: 1, 8, 16, 16>}]} {
    %c0 = arith.constant 0 : index
    %c0_0 = arith.constant 0 : index
    %c0_1 = arith.constant 0 : index
    %c0_2 = arith.constant 0 : index
    %0 = vector.load %arg1[%c0, %c0_0, %c0_1, %c0_2] : memref<1x4x20x20xf32, #tpu.memory_space<vmem>>, vector<1x1x16x20xf32>
    %1 = vector.shape_cast %0 : vector<1x1x16x20xf32> to vector<16x20xf32>
    %c0_3 = arith.constant 0 : index
    %c0_4 = arith.constant 0 : index
    %2 = memref.load %arg2[%c0_3, %c0_4] : memref<4x3xf32, #tpu.memory_space<smem>>
    %3 = vector.broadcast %2 : f32 to vector<16x20xf32>
    %4 = arith.mulf %1, %3 : vector<16x20xf32>
    %c0_5 = arith.constant 0 : index
    %c0_6 = arith.constant 0 : index
    %c2 = arith.constant 2 : index
    %c0_7 = arith.constant 0 : index
    %5 = vector.load %arg1[%c0_5, %c0_6, %c2, %c0_7] : memref<1x4x20x20xf32, #tpu.memory_space<vmem>>, vector<1x1x16x20xf32>
    %6 = vector.shape_cast %5 : vector<1x1x16x20xf32> to vector<16x20xf32>
    %c0_8 = arith.constant 0 : index
    %c1 = arith.constant 1 : index
    %7 = memref.load %arg2[%c0_8, %c1] : memref<4x3xf32, #tpu.memory_space<smem>>
    %8 = vector.broadcast %7 : f32 to vector<16x20xf32>
    %9 = arith.mulf %6, %8 : vector<16x20xf32>
    %10 = arith.addf %4, %9 : vector<16x20xf32>
    %c0_9 = arith.constant 0 : index
    %c0_10 = arith.constant 0 : index
    %c4 = arith.constant 4 : index
    %c0_11 = arith.constant 0 : index
    %11 = vector.load %arg1[%c0_9, %c0_10, %c4, %c0_11] : memref<1x4x20x20xf32, #tpu.memory_space<vmem>>, vector<1x1x16x20xf32>
    %12 = vector.shape_cast %11 : vector<1x1x16x20xf32> to vector<16x20xf32>
    %c0_12 = arith.constant 0 : index
    %c2_13 = arith.constant 2 : index
    %13 = memref.load %arg2[%c0_12, %c2_13] : memref<4x3xf32, #tpu.memory_space<smem>>
    %14 = vector.broadcast %13 : f32 to vector<16x20xf32>
    %15 = arith.mulf %12, %14 : vector<16x20xf32>
    %16 = arith.addf %10, %15 : vector<16x20xf32>
    %c0_14 = arith.constant 0 : index
    %c0_15 = arith.constant 0 : index
    %c0_16 = arith.constant 0 : index
    %17 = vector.load %arg7[%c0_14, %c0_15, %c0_16] : memref<4x16x20xf32, #tpu.memory_space<vmem>>, vector<1x16x20xf32>
    %18 = vector.shape_cast %17 : vector<1x16x20xf32> to vector<16x20xf32>
    %19 = vector.shape_cast %16 : vector<16x20xf32> to vector<1x16x20xf32>
    tpu.vector_store %arg7[%c0_14, %c0_15, %c0_16], %19 {strides = array<i32>} : memref<4x16x20xf32, #tpu.memory_space<vmem>>, vector<1x16x20xf32>,
    %c0_17 = arith.constant 0 : index
    %c1_18 = arith.constant 1 : index
    %c0_19 = arith.constant 0 : index
    %c0_20 = arith.constant 0 : index
    %20 = vector.load %arg1[%c0_17, %c1_18, %c0_19, %c0_20] : memref<1x4x20x20xf32, #tpu.memory_space<vmem>>, vector<1x1x16x20xf32>
    %21 = vector.shape_cast %20 : vector<1x1x16x20xf32> to vector<16x20xf32>
    %c1_21 = arith.constant 1 : index
    %c0_22 = arith.constant 0 : index
    %22 = memref.load %arg2[%c1_21, %c0_22] : memref<4x3xf32, #tpu.memory_space<smem>>
    %23 = vector.broadcast %22 : f32 to vector<16x20xf32>
    %24 = arith.mulf %21, %23 : vector<16x20xf32>
    %c0_23 = arith.constant 0 : index
    %c1_24 = arith.constant 1 : index
    %c2_25 = arith.constant 2 : index
    %c0_26 = arith.constant 0 : index
    %25 = vector.load %arg1[%c0_23, %c1_24, %c2_25, %c0_26] : memref<1x4x20x20xf32, #tpu.memory_space<vmem>>, vector<1x1x16x20xf32>
    %26 = vector.shape_cast %25 : vector<1x1x16x20xf32> to vector<16x20xf32>
    %c1_27 = arith.constant 1 : index
    %c1_28 = arith.constant 1 : index
    %27 = memref.load %arg2[%c1_27, %c1_28] : memref<4x3xf32, #tpu.memory_space<smem>>
    %28 = vector.broadcast %27 : f32 to vector<16x20xf32>
    %29 = arith.mulf %26, %28 : vector<16x20xf32>
    %30 = arith.addf %24, %29 : vector<16x20xf32>
    %c0_29 = arith.constant 0 : index
    %c1_30 = arith.constant 1 : index
    %c4_31 = arith.constant 4 : index
    %c0_32 = arith.constant 0 : index
    %31 = vector.load %arg1[%c0_29, %c1_30, %c4_31, %c0_32] : memref<1x4x20x20xf32, #tpu.memory_space<vmem>>, vector<1x1x16x20xf32>
    %32 = vector.shape_cast %31 : vector<1x1x16x20xf32> to vector<16x20xf32>
    %c1_33 = arith.constant 1 : index
    %c2_34 = arith.constant 2 : index
    %33 = memref.load %arg2[%c1_33, %c2_34] : memref<4x3xf32, #tpu.memory_space<smem>>
    %34 = vector.broadcast %33 : f32 to vector<16x20xf32>
    %35 = arith.mulf %32, %34 : vector<16x20xf32>
    %36 = arith.addf %30, %35 : vector<16x20xf32>
    %c1_35 = arith.constant 1 : index
    %c0_36 = arith.constant 0 : index
    %c0_37 = arith.constant 0 : index
    %37 = vector.load %arg7[%c1_35, %c0_36, %c0_37] : memref<4x16x20xf32, #tpu.memory_space<vmem>>, vector<1x16x20xf32>
    %38 = vector.shape_cast %37 : vector<1x16x20xf32> to vector<16x20xf32>
    %39 = vector.shape_cast %36 : vector<16x20xf32> to vector<1x16x20xf32>
    tpu.vector_store %arg7[%c1_35, %c0_36, %c0_37], %39 {strides = array<i32>} : memref<4x16x20xf32, #tpu.memory_space<vmem>>, vector<1x16x20xf32>,
    %c0_38 = arith.constant 0 : index
    %c2_39 = arith.constant 2 : index
    %c0_40 = arith.constant 0 : index
    %c0_41 = arith.constant 0 : index
    %40 = vector.load %arg1[%c0_38, %c2_39, %c0_40, %c0_41] : memref<1x4x20x20xf32, #tpu.memory_space<vmem>>, vector<1x1x16x20xf32>
    %41 = vector.shape_cast %40 : vector<1x1x16x20xf32> to vector<16x20xf32>
    %c2_42 = arith.constant 2 : index
    %c0_43 = arith.constant 0 : index
    %42 = memref.load %arg2[%c2_42, %c0_43] : memref<4x3xf32, #tpu.memory_space<smem>>
    %43 = vector.broadcast %42 : f32 to vector<16x20xf32>
    %44 = arith.mulf %41, %43 : vector<16x20xf32>
    %c0_44 = arith.constant 0 : index
    %c2_45 = arith.constant 2 : index
    %c2_46 = arith.constant 2 : index
    %c0_47 = arith.constant 0 : index
    %45 = vector.load %arg1[%c0_44, %c2_45, %c2_46, %c0_47] : memref<1x4x20x20xf32, #tpu.memory_space<vmem>>, vector<1x1x16x20xf32>
    %46 = vector.shape_cast %45 : vector<1x1x16x20xf32> to vector<16x20xf32>
    %c2_48 = arith.constant 2 : index
    %c1_49 = arith.constant 1 : index
    %47 = memref.load %arg2[%c2_48, %c1_49] : memref<4x3xf32, #tpu.memory_space<smem>>
    %48 = vector.broadcast %47 : f32 to vector<16x20xf32>
    %49 = arith.mulf %46, %48 : vector<16x20xf32>
    %50 = arith.addf %44, %49 : vector<16x20xf32>
    %c0_50 = arith.constant 0 : index
    %c2_51 = arith.constant 2 : index
    %c4_52 = arith.constant 4 : index
    %c0_53 = arith.constant 0 : index
    %51 = vector.load %arg1[%c0_50, %c2_51, %c4_52, %c0_53] : memref<1x4x20x20xf32, #tpu.memory_space<vmem>>, vector<1x1x16x20xf32>
    %52 = vector.shape_cast %51 : vector<1x1x16x20xf32> to vector<16x20xf32>
    %c2_54 = arith.constant 2 : index
    %c2_55 = arith.constant 2 : index
    %53 = memref.load %arg2[%c2_54, %c2_55] : memref<4x3xf32, #tpu.memory_space<smem>>
    %54 = vector.broadcast %53 : f32 to vector<16x20xf32>
    %55 = arith.mulf %52, %54 : vector<16x20xf32>
    %56 = arith.addf %50, %55 : vector<16x20xf32>
    %c2_56 = arith.constant 2 : index
    %c0_57 = arith.constant 0 : index
    %c0_58 = arith.constant 0 : index
    %57 = vector.load %arg7[%c2_56, %c0_57, %c0_58] : memref<4x16x20xf32, #tpu.memory_space<vmem>>, vector<1x16x20xf32>
    %58 = vector.shape_cast %57 : vector<1x16x20xf32> to vector<16x20xf32>
    %59 = vector.shape_cast %56 : vector<16x20xf32> to vector<1x16x20xf32>
    tpu.vector_store %arg7[%c2_56, %c0_57, %c0_58], %59 {strides = array<i32>} : memref<4x16x20xf32, #tpu.memory_space<vmem>>, vector<1x16x20xf32>,
    %c0_59 = arith.constant 0 : index
    %c3 = arith.constant 3 : index
    %c0_60 = arith.constant 0 : index
    %c0_61 = arith.constant 0 : index
    %60 = vector.load %arg1[%c0_59, %c3, %c0_60, %c0_61] : memref<1x4x20x20xf32, #tpu.memory_space<vmem>>, vector<1x1x16x20xf32>
    %61 = vector.shape_cast %60 : vector<1x1x16x20xf32> to vector<16x20xf32>
    %c3_62 = arith.constant 3 : index
    %c0_63 = arith.constant 0 : index
    %62 = memref.load %arg2[%c3_62, %c0_63] : memref<4x3xf32, #tpu.memory_space<smem>>
    %63 = vector.broadcast %62 : f32 to vector<16x20xf32>
    %64 = arith.mulf %61, %63 : vector<16x20xf32>
    %c0_64 = arith.constant 0 : index
    %c3_65 = arith.constant 3 : index
    %c2_66 = arith.constant 2 : index
    %c0_67 = arith.constant 0 : index
    %65 = vector.load %arg1[%c0_64, %c3_65, %c2_66, %c0_67] : memref<1x4x20x20xf32, #tpu.memory_space<vmem>>, vector<1x1x16x20xf32>
    %66 = vector.shape_cast %65 : vector<1x1x16x20xf32> to vector<16x20xf32>
    %c3_68 = arith.constant 3 : index
    %c1_69 = arith.constant 1 : index
    %67 = memref.load %arg2[%c3_68, %c1_69] : memref<4x3xf32, #tpu.memory_space<smem>>
    %68 = vector.broadcast %67 : f32 to vector<16x20xf32>
    %69 = arith.mulf %66, %68 : vector<16x20xf32>
    %70 = arith.addf %64, %69 : vector<16x20xf32>
    %c0_70 = arith.constant 0 : index
    %c3_71 = arith.constant 3 : index
    %c4_72 = arith.constant 4 : index
    %c0_73 = arith.constant 0 : index
    %71 = vector.load %arg1[%c0_70, %c3_71, %c4_72, %c0_73] : memref<1x4x20x20xf32, #tpu.memory_space<vmem>>, vector<1x1x16x20xf32>
    %72 = vector.shape_cast %71 : vector<1x1x16x20xf32> to vector<16x20xf32>
    %c3_74 = arith.constant 3 : index
    %c2_75 = arith.constant 2 : index
    %73 = memref.load %arg2[%c3_74, %c2_75] : memref<4x3xf32, #tpu.memory_space<smem>>
    %74 = vector.broadcast %73 : f32 to vector<16x20xf32>
    %75 = arith.mulf %72, %74 : vector<16x20xf32>
    %76 = arith.addf %70, %75 : vector<16x20xf32>
    %c3_76 = arith.constant 3 : index
    %c0_77 = arith.constant 0 : index
    %c0_78 = arith.constant 0 : index
    %77 = vector.load %arg7[%c3_76, %c0_77, %c0_78] : memref<4x16x20xf32, #tpu.memory_space<vmem>>, vector<1x16x20xf32>
    %78 = vector.shape_cast %77 : vector<1x16x20xf32> to vector<16x20xf32>
    %79 = vector.shape_cast %76 : vector<16x20xf32> to vector<1x16x20xf32>
    tpu.vector_store %arg7[%c3_76, %c0_77, %c0_78], %79 {strides = array<i32>} : memref<4x16x20xf32, #tpu.memory_space<vmem>>, vector<1x16x20xf32>,
    %80 = tpu.iota {dimensions = array<i32: 1>} : vector<16x16xi32>
    %c0_79 = arith.constant 0 : index
    %81 = memref.load %arg3[%c0_79] : memref<4xf32, #tpu.memory_space<smem>>
    %c0_80 = arith.constant 0 : index
    %c0_81 = arith.constant 0 : index
    %c0_82 = arith.constant 0 : index
    %82 = vector.load %arg7[%c0_80, %c0_81, %c0_82] : memref<4x16x20xf32, #tpu.memory_space<vmem>>, vector<1x16x16xf32>
    %83 = vector.shape_cast %82 : vector<1x16x16xf32> to vector<16x16xf32>
    %c0_i32 = arith.constant 0 : i32
    %84 = vector.broadcast %c0_i32 : i32 to vector<16x16xi32>
    %85 = arith.addi %80, %84 : vector<16x16xi32>
    %c2_i32 = arith.constant 2 : i32
    %86 = vector.broadcast %c2_i32 : i32 to vector<16x16xi32>
    %87 = arith.cmpi sge, %85, %86 : vector<16x16xi32>
    %c0_i32_83 = arith.constant 0 : i32
    %88 = vector.broadcast %c0_i32_83 : i32 to vector<16x16xi32>
    %89 = arith.addi %80, %88 : vector<16x16xi32>
    %c18_i32 = arith.constant 18 : i32
    %90 = vector.broadcast %c18_i32 : i32 to vector<16x16xi32>
    %91 = arith.cmpi slt, %89, %90 : vector<16x16xi32>
    %92 = arith.andi %87, %91 : vector<16x16xi1>
    %93 = vector.broadcast %81 : f32 to vector<16x16xf32>
    %94 = arith.addf %83, %93 : vector<16x16xf32>
    %95 = arith.select %92, %94, %83 : vector<16x16xi1>, vector<16x16xf32>
    %c0_84 = arith.constant 0 : index
    %c0_85 = arith.constant 0 : index
    %c2_86 = arith.constant 2 : index
    %96 = vector.load %arg7[%c0_84, %c0_85, %c2_86] : memref<4x16x20xf32, #tpu.memory_space<vmem>>, vector<1x16x16xf32>
    %97 = vector.shape_cast %96 : vector<1x16x16xf32> to vector<16x16xf32>
    %c2_i32_87 = arith.constant 2 : i32
    %98 = vector.broadcast %c2_i32_87 : i32 to vector<16x16xi32>
    %99 = arith.addi %80, %98 : vector<16x16xi32>
    %c2_i32_88 = arith.constant 2 : i32
    %100 = vector.broadcast %c2_i32_88 : i32 to vector<16x16xi32>
    %101 = arith.cmpi sge, %99, %100 : vector<16x16xi32>
    %c2_i32_89 = arith.constant 2 : i32
    %102 = vector.broadcast %c2_i32_89 : i32 to vector<16x16xi32>
    %103 = arith.addi %80, %102 : vector<16x16xi32>
    %c18_i32_90 = arith.constant 18 : i32
    %104 = vector.broadcast %c18_i32_90 : i32 to vector<16x16xi32>
    %105 = arith.cmpi slt, %103, %104 : vector<16x16xi32>
    %106 = arith.andi %101, %105 : vector<16x16xi1>
    %107 = vector.broadcast %81 : f32 to vector<16x16xf32>
    %108 = arith.addf %97, %107 : vector<16x16xf32>
    %109 = arith.select %106, %108, %97 : vector<16x16xi1>, vector<16x16xf32>
    %c0_91 = arith.constant 0 : index
    %c0_92 = arith.constant 0 : index
    %c4_93 = arith.constant 4 : index
    %110 = vector.load %arg7[%c0_91, %c0_92, %c4_93] : memref<4x16x20xf32, #tpu.memory_space<vmem>>, vector<1x16x16xf32>
    %111 = vector.shape_cast %110 : vector<1x16x16xf32> to vector<16x16xf32>
    %c4_i32 = arith.constant 4 : i32
    %112 = vector.broadcast %c4_i32 : i32 to vector<16x16xi32>
    %113 = arith.addi %80, %112 : vector<16x16xi32>
    %c2_i32_94 = arith.constant 2 : i32
    %114 = vector.broadcast %c2_i32_94 : i32 to vector<16x16xi32>
    %115 = arith.cmpi sge, %113, %114 : vector<16x16xi32>
    %c4_i32_95 = arith.constant 4 : i32
    %116 = vector.broadcast %c4_i32_95 : i32 to vector<16x16xi32>
    %117 = arith.addi %80, %116 : vector<16x16xi32>
    %c18_i32_96 = arith.constant 18 : i32
    %118 = vector.broadcast %c18_i32_96 : i32 to vector<16x16xi32>
    %119 = arith.cmpi slt, %117, %118 : vector<16x16xi32>
    %120 = arith.andi %115, %119 : vector<16x16xi1>
    %121 = vector.broadcast %81 : f32 to vector<16x16xf32>
    %122 = arith.addf %111, %121 : vector<16x16xf32>
    %123 = arith.select %120, %122, %111 : vector<16x16xi1>, vector<16x16xf32>
    %c0_97 = arith.constant 0 : index
    %c0_98 = arith.constant 0 : index
    %124 = memref.load %arg4[%c0_97, %c0_98] : memref<8x3xf32, #tpu.memory_space<smem>>
    %125 = vector.broadcast %124 : f32 to vector<16x16xf32>
    %126 = arith.mulf %95, %125 : vector<16x16xf32>
    %c0_99 = arith.constant 0 : index
    %127 = memref.load %arg5[%c0_99] : memref<8xf32, #tpu.memory_space<smem>>
    %128 = vector.broadcast %127 : f32 to vector<16x16xf32>
    %129 = arith.addf %126, %128 : vector<16x16xf32>
    %c0_100 = arith.constant 0 : index
    %c1_101 = arith.constant 1 : index
    %130 = memref.load %arg4[%c0_100, %c1_101] : memref<8x3xf32, #tpu.memory_space<smem>>
    %131 = vector.broadcast %130 : f32 to vector<16x16xf32>
    %132 = arith.mulf %109, %131 : vector<16x16xf32>
    %133 = arith.addf %129, %132 : vector<16x16xf32>
    %c0_102 = arith.constant 0 : index
    %c2_103 = arith.constant 2 : index
    %134 = memref.load %arg4[%c0_102, %c2_103] : memref<8x3xf32, #tpu.memory_space<smem>>
    %135 = vector.broadcast %134 : f32 to vector<16x16xf32>
    %136 = arith.mulf %123, %135 : vector<16x16xf32>
    %137 = arith.addf %133, %136 : vector<16x16xf32>
    %c0_104 = arith.constant 0 : index
    %c0_105 = arith.constant 0 : index
    %c0_106 = arith.constant 0 : index
    %c0_107 = arith.constant 0 : index
    %138 = vector.load %arg6[%c0_104, %c0_105, %c0_106, %c0_107] : memref<1x8x16x16xf32, #tpu.memory_space<vmem>>, vector<1x1x16x16xf32>
    %139 = vector.shape_cast %138 : vector<1x1x16x16xf32> to vector<16x16xf32>
    %140 = vector.shape_cast %137 : vector<16x16xf32> to vector<1x1x16x16xf32>
    tpu.vector_store %arg6[%c0_104, %c0_105, %c0_106, %c0_107], %140 {strides = array<i32>} : memref<1x8x16x16xf32, #tpu.memory_space<vmem>>, vector<1x1x16x16xf32>,
    %c1_108 = arith.constant 1 : index
    %c0_109 = arith.constant 0 : index
    %141 = memref.load %arg4[%c1_108, %c0_109] : memref<8x3xf32, #tpu.memory_space<smem>>
    %142 = vector.broadcast %141 : f32 to vector<16x16xf32>
    %143 = arith.mulf %95, %142 : vector<16x16xf32>
    %c1_110 = arith.constant 1 : index
    %144 = memref.load %arg5[%c1_110] : memref<8xf32, #tpu.memory_space<smem>>
    %145 = vector.broadcast %144 : f32 to vector<16x16xf32>
    %146 = arith.addf %143, %145 : vector<16x16xf32>
    %c1_111 = arith.constant 1 : index
    %c1_112 = arith.constant 1 : index
    %147 = memref.load %arg4[%c1_111, %c1_112] : memref<8x3xf32, #tpu.memory_space<smem>>
    %148 = vector.broadcast %147 : f32 to vector<16x16xf32>
    %149 = arith.mulf %109, %148 : vector<16x16xf32>
    %150 = arith.addf %146, %149 : vector<16x16xf32>
    %c1_113 = arith.constant 1 : index
    %c2_114 = arith.constant 2 : index
    %151 = memref.load %arg4[%c1_113, %c2_114] : memref<8x3xf32, #tpu.memory_space<smem>>
    %152 = vector.broadcast %151 : f32 to vector<16x16xf32>
    %153 = arith.mulf %123, %152 : vector<16x16xf32>
    %154 = arith.addf %150, %153 : vector<16x16xf32>
    %c0_115 = arith.constant 0 : index
    %c1_116 = arith.constant 1 : index
    %c0_117 = arith.constant 0 : index
    %c0_118 = arith.constant 0 : index
    %155 = vector.load %arg6[%c0_115, %c1_116, %c0_117, %c0_118] : memref<1x8x16x16xf32, #tpu.memory_space<vmem>>, vector<1x1x16x16xf32>
    %156 = vector.shape_cast %155 : vector<1x1x16x16xf32> to vector<16x16xf32>
    %157 = vector.shape_cast %154 : vector<16x16xf32> to vector<1x1x16x16xf32>
    tpu.vector_store %arg6[%c0_115, %c1_116, %c0_117, %c0_118], %157 {strides = array<i32>} : memref<1x8x16x16xf32, #tpu.memory_space<vmem>>, vector<1x1x16x16xf32>,
    %c1_119 = arith.constant 1 : index
    %158 = memref.load %arg3[%c1_119] : memref<4xf32, #tpu.memory_space<smem>>
    %c1_120 = arith.constant 1 : index
    %c0_121 = arith.constant 0 : index
    %c0_122 = arith.constant 0 : index
    %159 = vector.load %arg7[%c1_120, %c0_121, %c0_122] : memref<4x16x20xf32, #tpu.memory_space<vmem>>, vector<1x16x16xf32>
    %160 = vector.shape_cast %159 : vector<1x16x16xf32> to vector<16x16xf32>
    %c0_i32_123 = arith.constant 0 : i32
    %161 = vector.broadcast %c0_i32_123 : i32 to vector<16x16xi32>
    %162 = arith.addi %80, %161 : vector<16x16xi32>
    %c2_i32_124 = arith.constant 2 : i32
    %163 = vector.broadcast %c2_i32_124 : i32 to vector<16x16xi32>
    %164 = arith.cmpi sge, %162, %163 : vector<16x16xi32>
    %c0_i32_125 = arith.constant 0 : i32
    %165 = vector.broadcast %c0_i32_125 : i32 to vector<16x16xi32>
    %166 = arith.addi %80, %165 : vector<16x16xi32>
    %c18_i32_126 = arith.constant 18 : i32
    %167 = vector.broadcast %c18_i32_126 : i32 to vector<16x16xi32>
    %168 = arith.cmpi slt, %166, %167 : vector<16x16xi32>
    %169 = arith.andi %164, %168 : vector<16x16xi1>
    %170 = vector.broadcast %158 : f32 to vector<16x16xf32>
    %171 = arith.addf %160, %170 : vector<16x16xf32>
    %172 = arith.select %169, %171, %160 : vector<16x16xi1>, vector<16x16xf32>
    %c1_127 = arith.constant 1 : index
    %c0_128 = arith.constant 0 : index
    %c2_129 = arith.constant 2 : index
    %173 = vector.load %arg7[%c1_127, %c0_128, %c2_129] : memref<4x16x20xf32, #tpu.memory_space<vmem>>, vector<1x16x16xf32>
    %174 = vector.shape_cast %173 : vector<1x16x16xf32> to vector<16x16xf32>
    %c2_i32_130 = arith.constant 2 : i32
    %175 = vector.broadcast %c2_i32_130 : i32 to vector<16x16xi32>
    %176 = arith.addi %80, %175 : vector<16x16xi32>
    %c2_i32_131 = arith.constant 2 : i32
    %177 = vector.broadcast %c2_i32_131 : i32 to vector<16x16xi32>
    %178 = arith.cmpi sge, %176, %177 : vector<16x16xi32>
    %c2_i32_132 = arith.constant 2 : i32
    %179 = vector.broadcast %c2_i32_132 : i32 to vector<16x16xi32>
    %180 = arith.addi %80, %179 : vector<16x16xi32>
    %c18_i32_133 = arith.constant 18 : i32
    %181 = vector.broadcast %c18_i32_133 : i32 to vector<16x16xi32>
    %182 = arith.cmpi slt, %180, %181 : vector<16x16xi32>
    %183 = arith.andi %178, %182 : vector<16x16xi1>
    %184 = vector.broadcast %158 : f32 to vector<16x16xf32>
    %185 = arith.addf %174, %184 : vector<16x16xf32>
    %186 = arith.select %183, %185, %174 : vector<16x16xi1>, vector<16x16xf32>
    %c1_134 = arith.constant 1 : index
    %c0_135 = arith.constant 0 : index
    %c4_136 = arith.constant 4 : index
    %187 = vector.load %arg7[%c1_134, %c0_135, %c4_136] : memref<4x16x20xf32, #tpu.memory_space<vmem>>, vector<1x16x16xf32>
    %188 = vector.shape_cast %187 : vector<1x16x16xf32> to vector<16x16xf32>
    %c4_i32_137 = arith.constant 4 : i32
    %189 = vector.broadcast %c4_i32_137 : i32 to vector<16x16xi32>
    %190 = arith.addi %80, %189 : vector<16x16xi32>
    %c2_i32_138 = arith.constant 2 : i32
    %191 = vector.broadcast %c2_i32_138 : i32 to vector<16x16xi32>
    %192 = arith.cmpi sge, %190, %191 : vector<16x16xi32>
    %c4_i32_139 = arith.constant 4 : i32
    %193 = vector.broadcast %c4_i32_139 : i32 to vector<16x16xi32>
    %194 = arith.addi %80, %193 : vector<16x16xi32>
    %c18_i32_140 = arith.constant 18 : i32
    %195 = vector.broadcast %c18_i32_140 : i32 to vector<16x16xi32>
    %196 = arith.cmpi slt, %194, %195 : vector<16x16xi32>
    %197 = arith.andi %192, %196 : vector<16x16xi1>
    %198 = vector.broadcast %158 : f32 to vector<16x16xf32>
    %199 = arith.addf %188, %198 : vector<16x16xf32>
    %200 = arith.select %197, %199, %188 : vector<16x16xi1>, vector<16x16xf32>
    %c2_141 = arith.constant 2 : index
    %c0_142 = arith.constant 0 : index
    %201 = memref.load %arg4[%c2_141, %c0_142] : memref<8x3xf32, #tpu.memory_space<smem>>
    %202 = vector.broadcast %201 : f32 to vector<16x16xf32>
    %203 = arith.mulf %172, %202 : vector<16x16xf32>
    %c2_143 = arith.constant 2 : index
    %204 = memref.load %arg5[%c2_143] : memref<8xf32, #tpu.memory_space<smem>>
    %205 = vector.broadcast %204 : f32 to vector<16x16xf32>
    %206 = arith.addf %203, %205 : vector<16x16xf32>
    %c2_144 = arith.constant 2 : index
    %c1_145 = arith.constant 1 : index
    %207 = memref.load %arg4[%c2_144, %c1_145] : memref<8x3xf32, #tpu.memory_space<smem>>
    %208 = vector.broadcast %207 : f32 to vector<16x16xf32>
    %209 = arith.mulf %186, %208 : vector<16x16xf32>
    %210 = arith.addf %206, %209 : vector<16x16xf32>
    %c2_146 = arith.constant 2 : index
    %c2_147 = arith.constant 2 : index
    %211 = memref.load %arg4[%c2_146, %c2_147] : memref<8x3xf32, #tpu.memory_space<smem>>
    %212 = vector.broadcast %211 : f32 to vector<16x16xf32>
    %213 = arith.mulf %200, %212 : vector<16x16xf32>
    %214 = arith.addf %210, %213 : vector<16x16xf32>
    %c0_148 = arith.constant 0 : index
    %c2_149 = arith.constant 2 : index
    %c0_150 = arith.constant 0 : index
    %c0_151 = arith.constant 0 : index
    %215 = vector.load %arg6[%c0_148, %c2_149, %c0_150, %c0_151] : memref<1x8x16x16xf32, #tpu.memory_space<vmem>>, vector<1x1x16x16xf32>
    %216 = vector.shape_cast %215 : vector<1x1x16x16xf32> to vector<16x16xf32>
    %217 = vector.shape_cast %214 : vector<16x16xf32> to vector<1x1x16x16xf32>
    tpu.vector_store %arg6[%c0_148, %c2_149, %c0_150, %c0_151], %217 {strides = array<i32>} : memref<1x8x16x16xf32, #tpu.memory_space<vmem>>, vector<1x1x16x16xf32>,
    %c3_152 = arith.constant 3 : index
    %c0_153 = arith.constant 0 : index
    %218 = memref.load %arg4[%c3_152, %c0_153] : memref<8x3xf32, #tpu.memory_space<smem>>
    %219 = vector.broadcast %218 : f32 to vector<16x16xf32>
    %220 = arith.mulf %172, %219 : vector<16x16xf32>
    %c3_154 = arith.constant 3 : index
    %221 = memref.load %arg5[%c3_154] : memref<8xf32, #tpu.memory_space<smem>>
    %222 = vector.broadcast %221 : f32 to vector<16x16xf32>
    %223 = arith.addf %220, %222 : vector<16x16xf32>
    %c3_155 = arith.constant 3 : index
    %c1_156 = arith.constant 1 : index
    %224 = memref.load %arg4[%c3_155, %c1_156] : memref<8x3xf32, #tpu.memory_space<smem>>
    %225 = vector.broadcast %224 : f32 to vector<16x16xf32>
    %226 = arith.mulf %186, %225 : vector<16x16xf32>
    %227 = arith.addf %223, %226 : vector<16x16xf32>
    %c3_157 = arith.constant 3 : index
    %c2_158 = arith.constant 2 : index
    %228 = memref.load %arg4[%c3_157, %c2_158] : memref<8x3xf32, #tpu.memory_space<smem>>
    %229 = vector.broadcast %228 : f32 to vector<16x16xf32>
    %230 = arith.mulf %200, %229 : vector<16x16xf32>
    %231 = arith.addf %227, %230 : vector<16x16xf32>
    %c0_159 = arith.constant 0 : index
    %c3_160 = arith.constant 3 : index
    %c0_161 = arith.constant 0 : index
    %c0_162 = arith.constant 0 : index
    %232 = vector.load %arg6[%c0_159, %c3_160, %c0_161, %c0_162] : memref<1x8x16x16xf32, #tpu.memory_space<vmem>>, vector<1x1x16x16xf32>
    %233 = vector.shape_cast %232 : vector<1x1x16x16xf32> to vector<16x16xf32>
    %234 = vector.shape_cast %231 : vector<16x16xf32> to vector<1x1x16x16xf32>
    tpu.vector_store %arg6[%c0_159, %c3_160, %c0_161, %c0_162], %234 {strides = array<i32>} : memref<1x8x16x16xf32, #tpu.memory_space<vmem>>, vector<1x1x16x16xf32>,
    %c2_163 = arith.constant 2 : index
    %235 = memref.load %arg3[%c2_163] : memref<4xf32, #tpu.memory_space<smem>>
    %c2_164 = arith.constant 2 : index
    %c0_165 = arith.constant 0 : index
    %c0_166 = arith.constant 0 : index
    %236 = vector.load %arg7[%c2_164, %c0_165, %c0_166] : memref<4x16x20xf32, #tpu.memory_space<vmem>>, vector<1x16x16xf32>
    %237 = vector.shape_cast %236 : vector<1x16x16xf32> to vector<16x16xf32>
    %c0_i32_167 = arith.constant 0 : i32
    %238 = vector.broadcast %c0_i32_167 : i32 to vector<16x16xi32>
    %239 = arith.addi %80, %238 : vector<16x16xi32>
    %c2_i32_168 = arith.constant 2 : i32
    %240 = vector.broadcast %c2_i32_168 : i32 to vector<16x16xi32>
    %241 = arith.cmpi sge, %239, %240 : vector<16x16xi32>
    %c0_i32_169 = arith.constant 0 : i32
    %242 = vector.broadcast %c0_i32_169 : i32 to vector<16x16xi32>
    %243 = arith.addi %80, %242 : vector<16x16xi32>
    %c18_i32_170 = arith.constant 18 : i32
    %244 = vector.broadcast %c18_i32_170 : i32 to vector<16x16xi32>
    %245 = arith.cmpi slt, %243, %244 : vector<16x16xi32>
    %246 = arith.andi %241, %245 : vector<16x16xi1>
    %247 = vector.broadcast %235 : f32 to vector<16x16xf32>
    %248 = arith.addf %237, %247 : vector<16x16xf32>
    %249 = arith.select %246, %248, %237 : vector<16x16xi1>, vector<16x16xf32>
    %c2_171 = arith.constant 2 : index
    %c0_172 = arith.constant 0 : index
    %c2_173 = arith.constant 2 : index
    %250 = vector.load %arg7[%c2_171, %c0_172, %c2_173] : memref<4x16x20xf32, #tpu.memory_space<vmem>>, vector<1x16x16xf32>
    %251 = vector.shape_cast %250 : vector<1x16x16xf32> to vector<16x16xf32>
    %c2_i32_174 = arith.constant 2 : i32
    %252 = vector.broadcast %c2_i32_174 : i32 to vector<16x16xi32>
    %253 = arith.addi %80, %252 : vector<16x16xi32>
    %c2_i32_175 = arith.constant 2 : i32
    %254 = vector.broadcast %c2_i32_175 : i32 to vector<16x16xi32>
    %255 = arith.cmpi sge, %253, %254 : vector<16x16xi32>
    %c2_i32_176 = arith.constant 2 : i32
    %256 = vector.broadcast %c2_i32_176 : i32 to vector<16x16xi32>
    %257 = arith.addi %80, %256 : vector<16x16xi32>
    %c18_i32_177 = arith.constant 18 : i32
    %258 = vector.broadcast %c18_i32_177 : i32 to vector<16x16xi32>
    %259 = arith.cmpi slt, %257, %258 : vector<16x16xi32>
    %260 = arith.andi %255, %259 : vector<16x16xi1>
    %261 = vector.broadcast %235 : f32 to vector<16x16xf32>
    %262 = arith.addf %251, %261 : vector<16x16xf32>
    %263 = arith.select %260, %262, %251 : vector<16x16xi1>, vector<16x16xf32>
    %c2_178 = arith.constant 2 : index
    %c0_179 = arith.constant 0 : index
    %c4_180 = arith.constant 4 : index
    %264 = vector.load %arg7[%c2_178, %c0_179, %c4_180] : memref<4x16x20xf32, #tpu.memory_space<vmem>>, vector<1x16x16xf32>
    %265 = vector.shape_cast %264 : vector<1x16x16xf32> to vector<16x16xf32>
    %c4_i32_181 = arith.constant 4 : i32
    %266 = vector.broadcast %c4_i32_181 : i32 to vector<16x16xi32>
    %267 = arith.addi %80, %266 : vector<16x16xi32>
    %c2_i32_182 = arith.constant 2 : i32
    %268 = vector.broadcast %c2_i32_182 : i32 to vector<16x16xi32>
    %269 = arith.cmpi sge, %267, %268 : vector<16x16xi32>
    %c4_i32_183 = arith.constant 4 : i32
    %270 = vector.broadcast %c4_i32_183 : i32 to vector<16x16xi32>
    %271 = arith.addi %80, %270 : vector<16x16xi32>
    %c18_i32_184 = arith.constant 18 : i32
    %272 = vector.broadcast %c18_i32_184 : i32 to vector<16x16xi32>
    %273 = arith.cmpi slt, %271, %272 : vector<16x16xi32>
    %274 = arith.andi %269, %273 : vector<16x16xi1>
    %275 = vector.broadcast %235 : f32 to vector<16x16xf32>
    %276 = arith.addf %265, %275 : vector<16x16xf32>
    %277 = arith.select %274, %276, %265 : vector<16x16xi1>, vector<16x16xf32>
    %c4_185 = arith.constant 4 : index
    %c0_186 = arith.constant 0 : index
    %278 = memref.load %arg4[%c4_185, %c0_186] : memref<8x3xf32, #tpu.memory_space<smem>>
    %279 = vector.broadcast %278 : f32 to vector<16x16xf32>
    %280 = arith.mulf %249, %279 : vector<16x16xf32>
    %c4_187 = arith.constant 4 : index
    %281 = memref.load %arg5[%c4_187] : memref<8xf32, #tpu.memory_space<smem>>
    %282 = vector.broadcast %281 : f32 to vector<16x16xf32>
    %283 = arith.addf %280, %282 : vector<16x16xf32>
    %c4_188 = arith.constant 4 : index
    %c1_189 = arith.constant 1 : index
    %284 = memref.load %arg4[%c4_188, %c1_189] : memref<8x3xf32, #tpu.memory_space<smem>>
    %285 = vector.broadcast %284 : f32 to vector<16x16xf32>
    %286 = arith.mulf %263, %285 : vector<16x16xf32>
    %287 = arith.addf %283, %286 : vector<16x16xf32>
    %c4_190 = arith.constant 4 : index
    %c2_191 = arith.constant 2 : index
    %288 = memref.load %arg4[%c4_190, %c2_191] : memref<8x3xf32, #tpu.memory_space<smem>>
    %289 = vector.broadcast %288 : f32 to vector<16x16xf32>
    %290 = arith.mulf %277, %289 : vector<16x16xf32>
    %291 = arith.addf %287, %290 : vector<16x16xf32>
    %c0_192 = arith.constant 0 : index
    %c4_193 = arith.constant 4 : index
    %c0_194 = arith.constant 0 : index
    %c0_195 = arith.constant 0 : index
    %292 = vector.load %arg6[%c0_192, %c4_193, %c0_194, %c0_195] : memref<1x8x16x16xf32, #tpu.memory_space<vmem>>, vector<1x1x16x16xf32>
    %293 = vector.shape_cast %292 : vector<1x1x16x16xf32> to vector<16x16xf32>
    %294 = vector.shape_cast %291 : vector<16x16xf32> to vector<1x1x16x16xf32>
    tpu.vector_store %arg6[%c0_192, %c4_193, %c0_194, %c0_195], %294 {strides = array<i32>} : memref<1x8x16x16xf32, #tpu.memory_space<vmem>>, vector<1x1x16x16xf32>,
    %c5 = arith.constant 5 : index
    %c0_196 = arith.constant 0 : index
    %295 = memref.load %arg4[%c5, %c0_196] : memref<8x3xf32, #tpu.memory_space<smem>>
    %296 = vector.broadcast %295 : f32 to vector<16x16xf32>
    %297 = arith.mulf %249, %296 : vector<16x16xf32>
    %c5_197 = arith.constant 5 : index
    %298 = memref.load %arg5[%c5_197] : memref<8xf32, #tpu.memory_space<smem>>
    %299 = vector.broadcast %298 : f32 to vector<16x16xf32>
    %300 = arith.addf %297, %299 : vector<16x16xf32>
    %c5_198 = arith.constant 5 : index
    %c1_199 = arith.constant 1 : index
    %301 = memref.load %arg4[%c5_198, %c1_199] : memref<8x3xf32, #tpu.memory_space<smem>>
    %302 = vector.broadcast %301 : f32 to vector<16x16xf32>
    %303 = arith.mulf %263, %302 : vector<16x16xf32>
    %304 = arith.addf %300, %303 : vector<16x16xf32>
    %c5_200 = arith.constant 5 : index
    %c2_201 = arith.constant 2 : index
    %305 = memref.load %arg4[%c5_200, %c2_201] : memref<8x3xf32, #tpu.memory_space<smem>>
    %306 = vector.broadcast %305 : f32 to vector<16x16xf32>
    %307 = arith.mulf %277, %306 : vector<16x16xf32>
    %308 = arith.addf %304, %307 : vector<16x16xf32>
    %c0_202 = arith.constant 0 : index
    %c5_203 = arith.constant 5 : index
    %c0_204 = arith.constant 0 : index
    %c0_205 = arith.constant 0 : index
    %309 = vector.load %arg6[%c0_202, %c5_203, %c0_204, %c0_205] : memref<1x8x16x16xf32, #tpu.memory_space<vmem>>, vector<1x1x16x16xf32>
    %310 = vector.shape_cast %309 : vector<1x1x16x16xf32> to vector<16x16xf32>
    %311 = vector.shape_cast %308 : vector<16x16xf32> to vector<1x1x16x16xf32>
    tpu.vector_store %arg6[%c0_202, %c5_203, %c0_204, %c0_205], %311 {strides = array<i32>} : memref<1x8x16x16xf32, #tpu.memory_space<vmem>>, vector<1x1x16x16xf32>,
    %c3_206 = arith.constant 3 : index
    %312 = memref.load %arg3[%c3_206] : memref<4xf32, #tpu.memory_space<smem>>
    %c3_207 = arith.constant 3 : index
    %c0_208 = arith.constant 0 : index
    %c0_209 = arith.constant 0 : index
    %313 = vector.load %arg7[%c3_207, %c0_208, %c0_209] : memref<4x16x20xf32, #tpu.memory_space<vmem>>, vector<1x16x16xf32>
    %314 = vector.shape_cast %313 : vector<1x16x16xf32> to vector<16x16xf32>
    %c0_i32_210 = arith.constant 0 : i32
    %315 = vector.broadcast %c0_i32_210 : i32 to vector<16x16xi32>
    %316 = arith.addi %80, %315 : vector<16x16xi32>
    %c2_i32_211 = arith.constant 2 : i32
    %317 = vector.broadcast %c2_i32_211 : i32 to vector<16x16xi32>
    %318 = arith.cmpi sge, %316, %317 : vector<16x16xi32>
    %c0_i32_212 = arith.constant 0 : i32
    %319 = vector.broadcast %c0_i32_212 : i32 to vector<16x16xi32>
    %320 = arith.addi %80, %319 : vector<16x16xi32>
    %c18_i32_213 = arith.constant 18 : i32
    %321 = vector.broadcast %c18_i32_213 : i32 to vector<16x16xi32>
    %322 = arith.cmpi slt, %320, %321 : vector<16x16xi32>
    %323 = arith.andi %318, %322 : vector<16x16xi1>
    %324 = vector.broadcast %312 : f32 to vector<16x16xf32>
    %325 = arith.addf %314, %324 : vector<16x16xf32>
    %326 = arith.select %323, %325, %314 : vector<16x16xi1>, vector<16x16xf32>
    %c3_214 = arith.constant 3 : index
    %c0_215 = arith.constant 0 : index
    %c2_216 = arith.constant 2 : index
    %327 = vector.load %arg7[%c3_214, %c0_215, %c2_216] : memref<4x16x20xf32, #tpu.memory_space<vmem>>, vector<1x16x16xf32>
    %328 = vector.shape_cast %327 : vector<1x16x16xf32> to vector<16x16xf32>
    %c2_i32_217 = arith.constant 2 : i32
    %329 = vector.broadcast %c2_i32_217 : i32 to vector<16x16xi32>
    %330 = arith.addi %80, %329 : vector<16x16xi32>
    %c2_i32_218 = arith.constant 2 : i32
    %331 = vector.broadcast %c2_i32_218 : i32 to vector<16x16xi32>
    %332 = arith.cmpi sge, %330, %331 : vector<16x16xi32>
    %c2_i32_219 = arith.constant 2 : i32
    %333 = vector.broadcast %c2_i32_219 : i32 to vector<16x16xi32>
    %334 = arith.addi %80, %333 : vector<16x16xi32>
    %c18_i32_220 = arith.constant 18 : i32
    %335 = vector.broadcast %c18_i32_220 : i32 to vector<16x16xi32>
    %336 = arith.cmpi slt, %334, %335 : vector<16x16xi32>
    %337 = arith.andi %332, %336 : vector<16x16xi1>
    %338 = vector.broadcast %312 : f32 to vector<16x16xf32>
    %339 = arith.addf %328, %338 : vector<16x16xf32>
    %340 = arith.select %337, %339, %328 : vector<16x16xi1>, vector<16x16xf32>
    %c3_221 = arith.constant 3 : index
    %c0_222 = arith.constant 0 : index
    %c4_223 = arith.constant 4 : index
    %341 = vector.load %arg7[%c3_221, %c0_222, %c4_223] : memref<4x16x20xf32, #tpu.memory_space<vmem>>, vector<1x16x16xf32>
    %342 = vector.shape_cast %341 : vector<1x16x16xf32> to vector<16x16xf32>
    %c4_i32_224 = arith.constant 4 : i32
    %343 = vector.broadcast %c4_i32_224 : i32 to vector<16x16xi32>
    %344 = arith.addi %80, %343 : vector<16x16xi32>
    %c2_i32_225 = arith.constant 2 : i32
    %345 = vector.broadcast %c2_i32_225 : i32 to vector<16x16xi32>
    %346 = arith.cmpi sge, %344, %345 : vector<16x16xi32>
    %c4_i32_226 = arith.constant 4 : i32
    %347 = vector.broadcast %c4_i32_226 : i32 to vector<16x16xi32>
    %348 = arith.addi %80, %347 : vector<16x16xi32>
    %c18_i32_227 = arith.constant 18 : i32
    %349 = vector.broadcast %c18_i32_227 : i32 to vector<16x16xi32>
    %350 = arith.cmpi slt, %348, %349 : vector<16x16xi32>
    %351 = arith.andi %346, %350 : vector<16x16xi1>
    %352 = vector.broadcast %312 : f32 to vector<16x16xf32>
    %353 = arith.addf %342, %352 : vector<16x16xf32>
    %354 = arith.select %351, %353, %342 : vector<16x16xi1>, vector<16x16xf32>
    %c6 = arith.constant 6 : index
    %c0_228 = arith.constant 0 : index
    %355 = memref.load %arg4[%c6, %c0_228] : memref<8x3xf32, #tpu.memory_space<smem>>
    %356 = vector.broadcast %355 : f32 to vector<16x16xf32>
    %357 = arith.mulf %326, %356 : vector<16x16xf32>
    %c6_229 = arith.constant 6 : index
    %358 = memref.load %arg5[%c6_229] : memref<8xf32, #tpu.memory_space<smem>>
    %359 = vector.broadcast %358 : f32 to vector<16x16xf32>
    %360 = arith.addf %357, %359 : vector<16x16xf32>
    %c6_230 = arith.constant 6 : index
    %c1_231 = arith.constant 1 : index
    %361 = memref.load %arg4[%c6_230, %c1_231] : memref<8x3xf32, #tpu.memory_space<smem>>
    %362 = vector.broadcast %361 : f32 to vector<16x16xf32>
    %363 = arith.mulf %340, %362 : vector<16x16xf32>
    %364 = arith.addf %360, %363 : vector<16x16xf32>
    %c6_232 = arith.constant 6 : index
    %c2_233 = arith.constant 2 : index
    %365 = memref.load %arg4[%c6_232, %c2_233] : memref<8x3xf32, #tpu.memory_space<smem>>
    %366 = vector.broadcast %365 : f32 to vector<16x16xf32>
    %367 = arith.mulf %354, %366 : vector<16x16xf32>
    %368 = arith.addf %364, %367 : vector<16x16xf32>
    %c0_234 = arith.constant 0 : index
    %c6_235 = arith.constant 6 : index
    %c0_236 = arith.constant 0 : index
    %c0_237 = arith.constant 0 : index
    %369 = vector.load %arg6[%c0_234, %c6_235, %c0_236, %c0_237] : memref<1x8x16x16xf32, #tpu.memory_space<vmem>>, vector<1x1x16x16xf32>
    %370 = vector.shape_cast %369 : vector<1x1x16x16xf32> to vector<16x16xf32>
    %371 = vector.shape_cast %368 : vector<16x16xf32> to vector<1x1x16x16xf32>
    tpu.vector_store %arg6[%c0_234, %c6_235, %c0_236, %c0_237], %371 {strides = array<i32>} : memref<1x8x16x16xf32, #tpu.memory_space<vmem>>, vector<1x1x16x16xf32>,
    %c7 = arith.constant 7 : index
    %c0_238 = arith.constant 0 : index
    %372 = memref.load %arg4[%c7, %c0_238] : memref<8x3xf32, #tpu.memory_space<smem>>
    %373 = vector.broadcast %372 : f32 to vector<16x16xf32>
    %374 = arith.mulf %326, %373 : vector<16x16xf32>
    %c7_239 = arith.constant 7 : index
    %375 = memref.load %arg5[%c7_239] : memref<8xf32, #tpu.memory_space<smem>>
    %376 = vector.broadcast %375 : f32 to vector<16x16xf32>
    %377 = arith.addf %374, %376 : vector<16x16xf32>
    %c7_240 = arith.constant 7 : index
    %c1_241 = arith.constant 1 : index
    %378 = memref.load %arg4[%c7_240, %c1_241] : memref<8x3xf32, #tpu.memory_space<smem>>
    %379 = vector.broadcast %378 : f32 to vector<16x16xf32>
    %380 = arith.mulf %340, %379 : vector<16x16xf32>
    %381 = arith.addf %377, %380 : vector<16x16xf32>
    %c7_242 = arith.constant 7 : index
    %c2_243 = arith.constant 2 : index
    %382 = memref.load %arg4[%c7_242, %c2_243] : memref<8x3xf32, #tpu.memory_space<smem>>
    %383 = vector.broadcast %382 : f32 to vector<16x16xf32>
    %384 = arith.mulf %354, %383 : vector<16x16xf32>
    %385 = arith.addf %381, %384 : vector<16x16xf32>
    %c0_244 = arith.constant 0 : index
    %c7_245 = arith.constant 7 : index
    %c0_246 = arith.constant 0 : index
    %c0_247 = arith.constant 0 : index
    %386 = vector.load %arg6[%c0_244, %c7_245, %c0_246, %c0_247] : memref<1x8x16x16xf32, #tpu.memory_space<vmem>>, vector<1x1x16x16xf32>
    %387 = vector.shape_cast %386 : vector<1x1x16x16xf32> to vector<16x16xf32>
    %388 = vector.shape_cast %385 : vector<16x16xf32> to vector<1x1x16x16xf32>
    tpu.vector_store %arg6[%c0_244, %c7_245, %c0_246, %c0_247], %388 {strides = array<i32>} : memref<1x8x16x16xf32, #tpu.memory_space<vmem>>, vector<1x1x16x16xf32>,
    return
  }
  func.func @transform_0(%arg0: i32) -> (i32, i32, i32, i32) {
    %c0_i32 = arith.constant 0 : i32
    %c0_i32_0 = arith.constant 0 : i32
    %c0_i32_1 = arith.constant 0 : i32
    %c0_i32_2 = arith.constant 0 : i32
    return %arg0, %c0_i32, %c0_i32_0, %c0_i32_1 : i32, i32, i32, i32
  }
  func.func @transform_1(%arg0: i32) -> (i32, i32) {
    %c0_i32 = arith.constant 0 : i32
    %c0_i32_0 = arith.constant 0 : i32
    %c0_i32_1 = arith.constant 0 : i32
    return %c0_i32, %c0_i32_0 : i32, i32
  }
  func.func @transform_2(%arg0: i32) -> i32 {
    %c0_i32 = arith.constant 0 : i32
    %c0_i32_0 = arith.constant 0 : i32
    return %c0_i32 : i32
  }
  func.func @transform_3(%arg0: i32) -> (i32, i32) {
    %c0_i32 = arith.constant 0 : i32
    %c0_i32_0 = arith.constant 0 : i32
    %c0_i32_1 = arith.constant 0 : i32
    return %c0_i32, %c0_i32_0 : i32, i32
  }
  func.func @transform_4(%arg0: i32) -> i32 {
    %c0_i32 = arith.constant 0 : i32
    %c0_i32_0 = arith.constant 0 : i32
    return %c0_i32 : i32
  }
  func.func @transform_5(%arg0: i32) -> (i32, i32, i32, i32) {
    %c0_i32 = arith.constant 0 : i32
    %c0_i32_0 = arith.constant 0 : i32
    %c0_i32_1 = arith.constant 0 : i32
    %c0_i32_2 = arith.constant 0 : i32
    return %arg0, %c0_i32, %c0_i32_0, %c0_i32_1 : i32, i32, i32, i32
  }
}

</mosaic_0001>

<llo_original>
// kernel: tpu_custom_call.1
$region0: #{tpu_custom_call.1}
  #allocation0 [shape = 'u32[]', space=smem, size = 0x4, offset = 0x4, fixed_abs, tag = 'smem constant byte address 0x4 - core index']
  #allocation1 [shape = 'u32[144,128]{1,0:T(1,128)}', space=vmem, size = 0x12000, scoped, tag = 'internal scratch']
  #allocation2 [shape = 'f32[4,16,20]{2,1,0:T(8,128)}', space=vmem, size = 0x8000, scoped, tag = 'scratch operand']
  %s0 = inlined_call_operand.vmem [shape: f32[2,4,20,20], index: 0, kind: input, shape index: {}]
  %s1 = inlined_call_operand.vmem [shape: f32[4,3], index: 1, kind: input, shape index: {}]
  %s2 = inlined_call_operand.vmem [shape: f32[4], index: 2, kind: input, shape index: {}]
  %s3 = inlined_call_operand.vmem [shape: f32[8,3], index: 3, kind: input, shape index: {}]
  %s4 = inlined_call_operand.vmem [shape: f32[8], index: 4, kind: input, shape index: {}]
  %s5 = inlined_call_operand.hbm [shape: f32[2,8,16,16], index: 5, kind: output, shape index: {}]
  %s6 = sld [smem:[#allocation0]]
  $region69: #{tpu_custom_call.1} parent=0
    _
  %s8 = ssub.s32 1, %s6
  %s9 = scalar_select 0, %s8, %s6
  $region1: #{tpu_custom_call.1} parent=0
    #allocation3 [shape = 'u8[2048]{0}', space=smem, size = 0x800, scoped, tag = 'input window, operand 1, single buffered']
    #allocation4 [shape = 's32[2]{0}', space=sflag, size = 0x8, scoped, tag = 'scoped memory for tpu_custom_call.1']
    #allocation5 [shape = 's32[2]{0}', space=sflag, size = 0x8, scoped, tag = 'scoped memory for tpu_custom_call.1']
    #allocation6 [shape = 'u8[512]{0}', space=smem, size = 0x200, scoped, tag = 'input window, operand 2, single buffered']
    #allocation7 [shape = 's32[1]{0}', space=sflag, size = 0x4, scoped, tag = 'scoped memory for tpu_custom_call.1']
    #allocation8 [shape = 'u8[4096]{0}', space=smem, size = 0x1000, scoped, tag = 'input window, operand 3, single buffered']
    #allocation9 [shape = 'u8[512]{0}', space=smem, size = 0x200, scoped, tag = 'input window, operand 4, single buffered']
    #allocation10 [shape = 's32[1]{0}', space=sflag, size = 0x4, scoped, tag = 'scoped memory for tpu_custom_call.1']
    #allocation11 [shape = 'u8[131072]{0}', space=vmem, size = 0x20000, scoped, tag = 'output window, operand 0']
    %10 = vsyncpa [#allocation5], 0
    %11 = vsyncpa [#allocation7], 0
    %12 = vsyncpa [#allocation10], 0
    %13 = vsyncpa [#allocation4], 0
    %s14 = scalar_lea.sflag [#allocation4], 1
    %15 = vsyncpa %s14, 0
    loop: start=0, step=1, limit=4
    $region2: #{tpu_custom_call.1} parent=1 // loop_pre_header
      _
    $region3: #{tpu_custom_call.1} parent=1 // loop_header
      %s17 = sphi 0, %s21
      %p18 = scmp.ge.s32.totalorder %s17, 4
      %s27 = sphi 0, %s29
      %s30 = sphi 0, %s27
      %s31 = sphi 0, %s30
      %s47 = sphi 0, %s31
      %s51 = sphi 0, %s51
      %s53 = sphi 0, %s51
      %s54 = sphi 0, %s53
      %s68 = sphi 0, %s54
      %s72 = sphi 0, %s72
      %s74 = sphi 0, %s72
      %s75 = sphi 0, %s74
      %s89 = sphi 0, %s75
      %s93 = sphi 0, %s93
      %s95 = sphi 0, %s93
      %s96 = sphi 0, %s95
      %s110 = sphi 0, %s96
      %s114 = sphi 0, %s114
      %s116 = sphi 0, %s114
      %s117 = sphi 0, %s116
      %s131 = sphi 0, %s117
      %s137 = sphi 0, %s139
      %s140 = sphi 0, %s137
      %s141 = sphi 0, %s140
      %s157 = sphi 0, %s141
    $region4: #{tpu_custom_call.1} parent=1 // loop_header_branch
      %20 = sbr.rel (%p18) target = $region8
    $region5: #{tpu_custom_call.1} parent=1 // loop_body
      %s22 = ssub.s32 %s17, 1
      %s23 = ssub.s32 %s17, 2
      %s24 = sadd.s32 %s17, 1
      %s25 = ssub.s32 %s17, %s24
      %p26 = scmp.eq.s32.totalorder %s25, 0
      %s28 = sadd.s32 %s27, 1
      %s29 = scalar_select %p26, %s27, %s28
      %p32 = pneg %p26
      %p33 = scmp.eq.s32.totalorder %s17, 1
      %p34 = por %p32, %p33
      %p35 = scmp.ne.s32.totalorder %s27, %s30
      %p36 = scmp.eq.s32.totalorder %s17, 0
      %p37 = por %p35, %p36
      %p38 = scmp.ne.s32.totalorder %s27, %s30
      %p39 = scmp.eq.s32.totalorder %s22, 1
      %p40 = por %p38, %p39
      %p41 = scmp.ne.s32.totalorder %s30, %s31
      %p42 = scmp.eq.s32.totalorder %s22, 0
      %p43 = por %p41, %p42
      %p44 = scmp.ne.s32.totalorder %s30, %s31
      %p45 = scmp.eq.s32.totalorder %s23, 1
      %p46 = por %p44, %p45
      %p48 = scmp.ne.s32.totalorder %s31, %s47
      %p49 = scmp.eq.s32.totalorder %s23, 0
      %p50 = por %p48, %p49
      %s52 = sadd.s32 %s51, 1
      %p55 = scmp.eq.s32.totalorder %s17, 1
      %p56 = scmp.ne.s32.totalorder %s51, %s53
      %p57 = scmp.eq.s32.totalorder %s17, 0
      %p58 = por %p56, %p57
      %p59 = scmp.ne.s32.totalorder %s51, %s53
      %p60 = scmp.eq.s32.totalorder %s22, 1
      %p61 = por %p59, %p60
      %p62 = scmp.ne.s32.totalorder %s53, %s54
      %p63 = scmp.eq.s32.totalorder %s22, 0
      %p64 = por %p62, %p63
      %p65 = scmp.ne.s32.totalorder %s53, %s54
      %p66 = scmp.eq.s32.totalorder %s23, 1
      %p67 = por %p65, %p66
      %p69 = scmp.ne.s32.totalorder %s54, %s68
      %p70 = scmp.eq.s32.totalorder %s23, 0
      %p71 = por %p69, %p70
      %s73 = sadd.s32 %s72, 1
      %p76 = scmp.eq.s32.totalorder %s17, 1
      %p77 = scmp.ne.s32.totalorder %s72, %s74
      %p78 = scmp.eq.s32.totalorder %s17, 0
      %p79 = por %p77, %p78
      %p80 = scmp.ne.s32.totalorder %s72, %s74
      %p81 = scmp.eq.s32.totalorder %s22, 1
      %p82 = por %p80, %p81
      %p83 = scmp.ne.s32.totalorder %s74, %s75
      %p84 = scmp.eq.s32.totalorder %s22, 0
      %p85 = por %p83, %p84
      %p86 = scmp.ne.s32.totalorder %s74, %s75
      %p87 = scmp.eq.s32.totalorder %s23, 1
      %p88 = por %p86, %p87
      %p90 = scmp.ne.s32.totalorder %s75, %s89
      %p91 = scmp.eq.s32.totalorder %s23, 0
      %p92 = por %p90, %p91
      %s94 = sadd.s32 %s93, 1
      %p97 = scmp.eq.s32.totalorder %s17, 1
      %p98 = scmp.ne.s32.totalorder %s93, %s95
      %p99 = scmp.eq.s32.totalorder %s17, 0
      %p100 = por %p98, %p99
      %p101 = scmp.ne.s32.totalorder %s93, %s95
      %p102 = scmp.eq.s32.totalorder %s22, 1
      %p103 = por %p101, %p102
      %p104 = scmp.ne.s32.totalorder %s95, %s96
      %p105 = scmp.eq.s32.totalorder %s22, 0
      %p106 = por %p104, %p105
      %p107 = scmp.ne.s32.totalorder %s95, %s96
      %p108 = scmp.eq.s32.totalorder %s23, 1
      %p109 = por %p107, %p108
      %p111 = scmp.ne.s32.totalorder %s96, %s110
      %p112 = scmp.eq.s32.totalorder %s23, 0
      %p113 = por %p111, %p112
      %s115 = sadd.s32 %s114, 1
      %p118 = scmp.eq.s32.totalorder %s17, 1
      %p119 = scmp.ne.s32.totalorder %s114, %s116
      %p120 = scmp.eq.s32.totalorder %s17, 0
      %p121 = por %p119, %p120
      %p122 = scmp.ne.s32.totalorder %s114, %s116
      %p123 = scmp.eq.s32.totalorder %s22, 1
      %p124 = por %p122, %p123
      %p125 = scmp.ne.s32.totalorder %s116, %s117
      %p126 = scmp.eq.s32.totalorder %s22, 0
      %p127 = por %p125, %p126
      %p128 = scmp.ne.s32.totalorder %s116, %s117
      %p129 = scmp.eq.s32.totalorder %s23, 1
      %p130 = por %p128, %p129
      %p132 = scmp.ne.s32.totalorder %s117, %s131
      %p133 = scmp.eq.s32.totalorder %s23, 0
      %p134 = por %p132, %p133
      %s135 = ssub.s32 %s17, %s24
      %p136 = scmp.eq.s32.totalorder %s135, 0
      %s138 = sadd.s32 %s137, 1
      %s139 = scalar_select %p136, %s137, %s138
      %p142 = pneg %p136
      %p143 = scmp.eq.s32.totalorder %s17, 1
      %p144 = por %p142, %p143
      %p145 = scmp.ne.s32.totalorder %s137, %s140
      %p146 = scmp.eq.s32.totalorder %s17, 0
      %p147 = por %p145, %p146
      %p148 = scmp.ne.s32.totalorder %s137, %s140
      %p149 = scmp.eq.s32.totalorder %s22, 1
      %p150 = por %p148, %p149
      %p151 = scmp.ne.s32.totalorder %s140, %s141
      %p152 = scmp.eq.s32.totalorder %s22, 0
      %p153 = por %p151, %p152
      %p154 = scmp.ne.s32.totalorder %s140, %s141
      %p155 = scmp.eq.s32.totalorder %s23, 1
      %p156 = por %p154, %p155
      %p158 = scmp.ne.s32.totalorder %s141, %s157
      %p159 = scmp.eq.s32.totalorder %s23, 0
      %p160 = por %p158, %p159
      %p161 = scmp.le.s32.totalorder 1, %s17
      %p162 = scmp.lt.s32.totalorder %s17, 3
      %p163 = pnand %p161, %p162
      %p164 = pneg %p163
      // Predicated region
      $region9: #{tpu_custom_call.1} parent=5 // pred_check
        _
      $region10: #{tpu_custom_call.1} parent=5 // pred_check_branch
        %166 = sbr.rel (%p163) target = $region12
      $region11: #{tpu_custom_call.1} parent=5 // pred_region
        %s167 = ssub.s32 %s17, 1
        // Predicated region
        $region13: #{tpu_custom_call.1} parent=11 // pred_check
          %p168 = pneg %p64
        $region14: #{tpu_custom_call.1} parent=11 // pred_check_branch
          %170 = sbr.rel (%p168) target = $region16
        $region15: #{tpu_custom_call.1} parent=11 // pred_region
          %s172 = ssub.s32 64, 64
          %173 = vsyncadd [#allocation5], %s172
          %s175 = sshll.u32 %s1, 4
          %s176 = int_to_ptr.vmem [resolvable:$true] %s175
          %178 = dma.vmem_to_smem %s176, 64, [#allocation3], [#allocation5]
        $region16: #{tpu_custom_call.1} parent=11 // pred_fallthru
          _
        // Predicated region
        $region17: #{tpu_custom_call.1} parent=11 // pred_check
          %p179 = pneg %p85
        $region18: #{tpu_custom_call.1} parent=11 // pred_check_branch
          %181 = sbr.rel (%p179) target = $region20
        $region19: #{tpu_custom_call.1} parent=11 // pred_region
          %s183 = ssub.s32 16, 16
          %184 = vsyncadd [#allocation7], %s183
          %s186 = sshll.u32 %s2, 4
          %s187 = int_to_ptr.vmem [resolvable:$true] %s186
          %189 = dma.vmem_to_smem %s187, 16, [#allocation6], [#allocation7]
        $region20: #{tpu_custom_call.1} parent=11 // pred_fallthru
          _
        // Predicated region
        $region21: #{tpu_custom_call.1} parent=11 // pred_check
          %p190 = pneg %p106
        $region22: #{tpu_custom_call.1} parent=11 // pred_check_branch
          %192 = sbr.rel (%p190) target = $region24
        $region23: #{tpu_custom_call.1} parent=11 // pred_region
          %s194 = ssub.s32 128, 128
          %195 = vsyncadd [#allocation7], %s194
          %s197 = sshll.u32 %s3, 4
          %s198 = int_to_ptr.vmem [resolvable:$true] %s197
          %200 = dma.vmem_to_smem %s198, 128, [#allocation8], [#allocation7]
        $region24: #{tpu_custom_call.1} parent=11 // pred_fallthru
          _
        // Predicated region
        $region25: #{tpu_custom_call.1} parent=11 // pred_check
          %p201 = pneg %p127
        $region26: #{tpu_custom_call.1} parent=11 // pred_check_branch
          %203 = sbr.rel (%p201) target = $region28
        $region27: #{tpu_custom_call.1} parent=11 // pred_region
          %s205 = ssub.s32 16, 16
          %206 = vsyncadd [#allocation10], %s205
          %s208 = sshll.u32 %s4, 4
          %s209 = int_to_ptr.vmem [resolvable:$true] %s208
          %211 = dma.vmem_to_smem %s209, 16, [#allocation9], [#allocation10]
        $region28: #{tpu_custom_call.1} parent=11 // pred_fallthru
          _
      $region12: #{tpu_custom_call.1} parent=5 // pred_fallthru
        _
      %p212 = scmp.lt.s32.totalorder %s17, 2
      // Predicated region
      $region29: #{tpu_custom_call.1} parent=5 // pred_check
        %p213 = pneg %p212
      $region30: #{tpu_custom_call.1} parent=5 // pred_check_branch
        %215 = sbr.rel (%p213) target = $region32
      $region31: #{tpu_custom_call.1} parent=5 // pred_region
        // Predicated region
        $region33: #{tpu_custom_call.1} parent=31 // pred_check
          %p216 = pneg %p37
        $region34: #{tpu_custom_call.1} parent=31 // pred_check_branch
          %218 = sbr.rel (%p216) target = $region36
        $region35: #{tpu_custom_call.1} parent=31 // pred_region
          %p219 = scmp.lt.s32.totalorder %s17, 1
          %s220 = scalar_select %p219, %s17, 1
          %s221 = smul.addr %s220, 12
          %s222 = smul.addr %s221, 8
          %s223 = scalar_lea.vmem %s0, %s222
        $region36: #{tpu_custom_call.1} parent=31 // pred_fallthru
          _
      $region32: #{tpu_custom_call.1} parent=5 // pred_fallthru
        _
      %p224 = scmp.le.s32.totalorder 1, %s17
      %p225 = scmp.lt.s32.totalorder %s17, 3
      %p226 = pnand %p224, %p225
      %p227 = pneg %p226
      // Predicated region
      $region37: #{tpu_custom_call.1} parent=5 // pred_check
        _
      $region38: #{tpu_custom_call.1} parent=5 // pred_check_branch
        %229 = sbr.rel (%p226) target = $region40
      $region39: #{tpu_custom_call.1} parent=5 // pred_region
        %s230 = ssub.s32 %s17, 1
        // Predicated region
        $region41: #{tpu_custom_call.1} parent=39 // pred_check
          %p231 = pneg %p64
        $region42: #{tpu_custom_call.1} parent=39 // pred_check_branch
          %233 = sbr.rel (%p231) target = $region44
        $region43: #{tpu_custom_call.1} parent=39 // pred_region
          %234 = dma.done [#allocation5], 64
        $region44: #{tpu_custom_call.1} parent=39 // pred_fallthru
          _
        // Predicated region
        $region45: #{tpu_custom_call.1} parent=39 // pred_check
          %p235 = pneg %p85
        $region46: #{tpu_custom_call.1} parent=39 // pred_check_branch
          %237 = sbr.rel (%p235) target = $region48
        $region47: #{tpu_custom_call.1} parent=39 // pred_region
          %238 = dma.done [#allocation7], 16
        $region48: #{tpu_custom_call.1} parent=39 // pred_fallthru
          _
        // Predicated region
        $region49: #{tpu_custom_call.1} parent=39 // pred_check
          %p239 = pneg %p106
        $region50: #{tpu_custom_call.1} parent=39 // pred_check_branch
          %241 = sbr.rel (%p239) target = $region52
        $region51: #{tpu_custom_call.1} parent=39 // pred_region
          %242 = dma.done [#allocation7], 128
        $region52: #{tpu_custom_call.1} parent=39 // pred_fallthru
          _
        // Predicated region
        $region53: #{tpu_custom_call.1} parent=39 // pred_check
          %p243 = pneg %p127
        $region54: #{tpu_custom_call.1} parent=39 // pred_check_branch
          %245 = sbr.rel (%p243) target = $region56
        $region55: #{tpu_custom_call.1} parent=39 // pred_region
          %246 = dma.done [#allocation10], 16
        $region56: #{tpu_custom_call.1} parent=39 // pred_fallthru
          _
        %247 = sfence
        %p248 = scmp.lt.s32.totalorder %s22, 1
        %s249 = scalar_select %p248, %s22, 1
        %s250 = smul.addr %s249, 12
        %s251 = smul.addr %s250, 8
        %s252 = scalar_lea.vmem %s0, %s251
        %p253 = pneg %p43
        %p254 = pneg %p40
        %p255 = pneg %p64
        %p256 = pneg %p61
        %p257 = pneg %p85
        %p258 = pneg %p82
        %p259 = pneg %p106
        %p260 = pneg %p103
        %p261 = pneg %p127
        %p262 = pneg %p124
        %p263 = pneg %p153
        %p264 = pneg %p150
        %s265 = sand.u32 %s140, 1
        %s266 = scalar_lea.sflag [#allocation4], %s265
        %s267 = sand.u32 %s140, 1
        %s268 = smul.addr %s267, 128
        %s269 = scalar_lea.vmem [#allocation11], %s268
        %p270 = scmp.lt.s32.totalorder %s22, 1
        %s271 = scalar_select %p270, %s22, 1
        %s272 = smul.addr %s271, 12
        %s273 = smul.addr %s272, 8
        %s274 = scalar_lea.vmem %s0, %s273
        %v275 = vld [vmem:[%s274] sm:$0xff]
        %v276 = vld [vmem:[%s274 + $0x8] sm:$0xff]
        %s277 = sld [smem:[#allocation3]]
        %v278 = vstv %s277
        %v279 = vmul.f32 %v275, %v278
        %v280 = vmul.f32 %v276, %v278
        %v281 = vld [vmem:[%s274 + $0x2] sm:$0xff]
        %v282 = vld [vmem:[%s274 + $0xa] sm:$0xff]
        %s283 = sld [smem:[#allocation3 + $0x1]]
        %v284 = vstv %s283
        %v285 = vmul.f32 %v281, %v284
        %v286 = vmul.f32 %v282, %v284
        %v287 = vadd.f32 %v279, %v285
        %v288 = vadd.f32 %v280, %v286
        %v289 = vld [vmem:[%s274 + $0x4] sm:$0xff]
        %v290 = vld [vmem:[%s274 + $0xc] sm:$0xff]
        %s291 = sld [smem:[#allocation3 + $0x2]]
        %v292 = vstv %s291
        %v293 = vmul.f32 %v289, %v292
        %v294 = vmul.f32 %v290, %v292
        %v295 = vadd.f32 %v287, %v293
        %v296 = vadd.f32 %v288, %v294
        %vm297 = vcmask 162816
        %298 = vst.msk [vmem:[#allocation2] sm:$0xff] %vm297, %v295
        %299 = vst.msk [vmem:[#allocation2 + $0x8] sm:$0xff] %vm297, %v296
        %s300 = scalar_lea.vmem %s274, 24
        %v301 = vld [vmem:[%s300] sm:$0xff]
        %v302 = vld [vmem:[%s300 + $0x8] sm:$0xff]
        %s303 = sld [smem:[#allocation3 + $0x80]]
        %v304 = vstv %s303
        %v305 = vmul.f32 %v301, %v304
        %v306 = vmul.f32 %v302, %v304
        %v307 = vld [vmem:[%s300 + $0x2] sm:$0xff]
        %v308 = vld [vmem:[%s300 + $0xa] sm:$0xff]
        %s309 = sld [smem:[#allocation3 + $0x81]]
        %v310 = vstv %s309
        %v311 = vmul.f32 %v307, %v310
        %v312 = vmul.f32 %v308, %v310
        %v313 = vadd.f32 %v305, %v311
        %v314 = vadd.f32 %v306, %v312
        %v315 = vld [vmem:[%s300 + $0x4] sm:$0xff]
        %v316 = vld [vmem:[%s300 + $0xc] sm:$0xff]
        %s317 = sld [smem:[#allocation3 + $0x82]]
        %v318 = vstv %s317
        %v319 = vmul.f32 %v315, %v318
        %v320 = vmul.f32 %v316, %v318
        %v321 = vadd.f32 %v313, %v319
        %v322 = vadd.f32 %v314, %v320
        %s323 = scalar_lea.vmem [#allocation2], 16
        %324 = vst.msk [vmem:[%s323] sm:$0xff] %vm297, %v321
        %325 = vst.msk [vmem:[%s323 + $0x8] sm:$0xff] %vm297, %v322
        %s326 = scalar_lea.vmem %s274, 48
        %v327 = vld [vmem:[%s326] sm:$0xff]
        %v328 = vld [vmem:[%s326 + $0x8] sm:$0xff]
        %s329 = sld [smem:[#allocation3 + $0x100]]
        %v330 = vstv %s329
        %v331 = vmul.f32 %v327, %v330
        %v332 = vmul.f32 %v328, %v330
        %v333 = vld [vmem:[%s326 + $0x2] sm:$0xff]
        %v334 = vld [vmem:[%s326 + $0xa] sm:$0xff]
        %s335 = sld [smem:[#allocation3 + $0x101]]
        %v336 = vstv %s335
        %v337 = vmul.f32 %v333, %v336
        %v338 = vmul.f32 %v334, %v336
        %v339 = vadd.f32 %v331, %v337
        %v340 = vadd.f32 %v332, %v338
        %v341 = vld [vmem:[%s326 + $0x4] sm:$0xff]
        %v342 = vld [vmem:[%s326 + $0xc] sm:$0xff]
        %s343 = sld [smem:[#allocation3 + $0x102]]
        %v344 = vstv %s343
        %v345 = vmul.f32 %v341, %v344
        %v346 = vmul.f32 %v342, %v344
        %v347 = vadd.f32 %v339, %v345
        %v348 = vadd.f32 %v340, %v346
        %s349 = scalar_lea.vmem [#allocation2], 32
        %350 = vst.msk [vmem:[%s349] sm:$0xff] %vm297, %v347
        %351 = vst.msk [vmem:[%s349 + $0x8] sm:$0xff] %vm297, %v348
        %s352 = scalar_lea.vmem %s274, 72
        %v353 = vld [vmem:[%s352] sm:$0xff]
        %v354 = vld [vmem:[%s352 + $0x8] sm:$0xff]
        %s355 = sld [smem:[#allocation3 + $0x180]]
        %v356 = vstv %s355
        %v357 = vmul.f32 %v353, %v356
        %v358 = vmul.f32 %v354, %v356
        %v359 = vld [vmem:[%s352 + $0x2] sm:$0xff]
        %v360 = vld [vmem:[%s352 + $0xa] sm:$0xff]
        %s361 = sld [smem:[#allocation3 + $0x181]]
        %v362 = vstv %s361
        %v363 = vmul.f32 %v359, %v362
        %v364 = vmul.f32 %v360, %v362
        %v365 = vadd.f32 %v357, %v363
        %v366 = vadd.f32 %v358, %v364
        %v367 = vld [vmem:[%s352 + $0x4] sm:$0xff]
        %v368 = vld [vmem:[%s352 + $0xc] sm:$0xff]
        %s369 = sld [smem:[#allocation3 + $0x182]]
        %v370 = vstv %s369
        %v371 = vmul.f32 %v367, %v370
        %v372 = vmul.f32 %v368, %v370
        %v373 = vadd.f32 %v365, %v371
        %v374 = vadd.f32 %v366, %v372
        %s375 = scalar_lea.vmem [#allocation2], 48
        %376 = vst.msk [vmem:[%s375] sm:$0xff] %vm297, %v373
        %377 = vst.msk [vmem:[%s375 + $0x8] sm:$0xff] %vm297, %v374
        %v378 = vlaneseq
        %v379 = vand.u32 %v378, 127
        %s380 = sld [smem:[#allocation6]]
        %v381 = vld [vmem:[#allocation2] sm:$0xff]
        %v382 = vld [vmem:[#allocation2 + $0x8] sm:$0xff]
        %vm383 = vcmp.ge.s32.totalorder %v379, 2
        %vm384 = vcmp.lt.s32.totalorder %v379, 18
        %vm385 = vmand %vm383, %vm384
        %v386 = vstv %s380
        %v387 = vadd.f32 %v381, %v386
        %v388 = vadd.f32 %v382, %v386
        %v389 = vsel %vm385, %v387, %v381
        %v390 = vsel %vm385, %v388, %v382
        %v391 = vadd.s32 %v379, 2
        %vm392 = vcmp.ge.s32.totalorder %v391, 2
        %vm393 = vcmp.lt.s32.totalorder %v391, 18
        %vm394 = vmand %vm392, %vm393
        %397 = vrot.lane.b32.xlu0 %v387, 126
        %v398 = vpop.permute.xlu0 %397
        %399 = vrot.lane.b32.xlu0 %v388, 126
        %v400 = vpop.permute.xlu0 %399
        %405 = vrot.lane.b32.xlu0 %v381, 126
        %v406 = vpop.permute.xlu0 %405
        %407 = vrot.lane.b32.xlu0 %v382, 126
        %v408 = vpop.permute.xlu0 %407
        %v411 = vsel %vm394, %v398, %v406
        %v412 = vsel %vm394, %v400, %v408
        %v413 = vadd.s32 %v379, 4
        %vm414 = vcmp.ge.s32.totalorder %v413, 2
        %vm415 = vcmp.lt.s32.totalorder %v413, 18
        %vm416 = vmand %vm414, %vm415
        %417 = vrot.lane.b32.xlu0 %v387, 124
        %v418 = vpop.permute.xlu0 %417
        %419 = vrot.lane.b32.xlu0 %v388, 124
        %v420 = vpop.permute.xlu0 %419
        %423 = vrot.lane.b32.xlu0 %v381, 124
        %v424 = vpop.permute.xlu0 %423
        %425 = vrot.lane.b32.xlu0 %v382, 124
        %v426 = vpop.permute.xlu0 %425
        %v429 = vsel %vm416, %v418, %v424
        %v430 = vsel %vm416, %v420, %v426
        %s431 = sld [smem:[#allocation8]]
        %v432 = vstv %s431
        %v433 = vmul.f32 %v389, %v432
        %v434 = vmul.f32 %v390, %v432
        %s435 = sld [smem:[#allocation9]]
        %v436 = vstv %s435
        %v437 = vadd.f32 %v433, %v436
        %v438 = vadd.f32 %v434, %v436
        %s439 = sld [smem:[#allocation8 + $0x1]]
        %v440 = vstv %s439
        %v441 = vmul.f32 %v411, %v440
        %v442 = vmul.f32 %v412, %v440
        %v443 = vadd.f32 %v437, %v441
        %v444 = vadd.f32 %v438, %v442
        %s445 = sld [smem:[#allocation8 + $0x2]]
        %v446 = vstv %s445
        %v447 = vmul.f32 %v429, %v446
        %v448 = vmul.f32 %v430, %v446
        %v449 = vadd.f32 %v443, %v447
        %v450 = vadd.f32 %v444, %v448
        %vm451 = vcmask 130048
        %452 = vst.msk [vmem:[%s269] sm:$0xff] %vm451, %v449
        %453 = vst.msk [vmem:[%s269 + $0x8] sm:$0xff] %vm451, %v450
        %s454 = sld [smem:[#allocation8 + $0x80]]
        %v455 = vstv %s454
        %v456 = vmul.f32 %v389, %v455
        %v457 = vmul.f32 %v390, %v455
        %s458 = sld [smem:[#allocation9 + $0x1]]
        %v459 = vstv %s458
        %v460 = vadd.f32 %v456, %v459
        %v461 = vadd.f32 %v457, %v459
        %s462 = sld [smem:[#allocation8 + $0x81]]
        %v463 = vstv %s462
        %v464 = vmul.f32 %v411, %v463
        %v465 = vmul.f32 %v412, %v463
        %v466 = vadd.f32 %v460, %v464
        %v467 = vadd.f32 %v461, %v465
        %s468 = sld [smem:[#allocation8 + $0x82]]
        %v469 = vstv %s468
        %v470 = vmul.f32 %v429, %v469
        %v471 = vmul.f32 %v430, %v469
        %v472 = vadd.f32 %v466, %v470
        %v473 = vadd.f32 %v467, %v471
        %s474 = scalar_lea.vmem %s269, 16 [#allocation11]
        %475 = vst.msk [vmem:[%s474] sm:$0xff] %vm451, %v472
        %476 = vst.msk [vmem:[%s474 + $0x8] sm:$0xff] %vm451, %v473
        %s477 = sld [smem:[#allocation6 + $0x1]]
        %v478 = vld [vmem:[%s323] sm:$0xff]
        %v479 = vld [vmem:[%s323 + $0x8] sm:$0xff]
        %v480 = vstv %s477
        %v481 = vadd.f32 %v478, %v480
        %v482 = vadd.f32 %v479, %v480
        %v483 = vsel %vm385, %v481, %v478
        %v484 = vsel %vm385, %v482, %v479
        %487 = vrot.lane.b32.xlu0 %v481, 126
        %v488 = vpop.permute.xlu0 %487
        %489 = vrot.lane.b32.xlu0 %v482, 126
        %v490 = vpop.permute.xlu0 %489
        %495 = vrot.lane.b32.xlu0 %v478, 126
        %v496 = vpop.permute.xlu0 %495
        %497 = vrot.lane.b32.xlu0 %v479, 126
        %v498 = vpop.permute.xlu0 %497
        %v501 = vsel %vm394, %v488, %v496
        %v502 = vsel %vm394, %v490, %v498
        %503 = vrot.lane.b32.xlu0 %v481, 124
        %v504 = vpop.permute.xlu0 %503
        %505 = vrot.lane.b32.xlu0 %v482, 124
        %v506 = vpop.permute.xlu0 %505
        %509 = vrot.lane.b32.xlu0 %v478, 124
        %v510 = vpop.permute.xlu0 %509
        %511 = vrot.lane.b32.xlu0 %v479, 124
        %v512 = vpop.permute.xlu0 %511
        %v515 = vsel %vm416, %v504, %v510
        %v516 = vsel %vm416, %v506, %v512
        %s517 = sld [smem:[#allocation8 + $0x100]]
        %v518 = vstv %s517
        %v519 = vmul.f32 %v483, %v518
        %v520 = vmul.f32 %v484, %v518
        %s521 = sld [smem:[#allocation9 + $0x2]]
        %v522 = vstv %s521
        %v523 = vadd.f32 %v519, %v522
        %v524 = vadd.f32 %v520, %v522
        %s525 = sld [smem:[#allocation8 + $0x101]]
        %v526 = vstv %s525
        %v527 = vmul.f32 %v501, %v526
        %v528 = vmul.f32 %v502, %v526
        %v529 = vadd.f32 %v523, %v527
        %v530 = vadd.f32 %v524, %v528
        %s531 = sld [smem:[#allocation8 + $0x102]]
        %v532 = vstv %s531
        %v533 = vmul.f32 %v515, %v532
        %v534 = vmul.f32 %v516, %v532
        %v535 = vadd.f32 %v529, %v533
        %v536 = vadd.f32 %v530, %v534
        %s537 = scalar_lea.vmem %s269, 32 [#allocation11]
        %538 = vst.msk [vmem:[%s537] sm:$0xff] %vm451, %v535
        %539 = vst.msk [vmem:[%s537 + $0x8] sm:$0xff] %vm451, %v536
        %s540 = sld [smem:[#allocation8 + $0x180]]
        %v541 = vstv %s540
        %v542 = vmul.f32 %v483, %v541
        %v543 = vmul.f32 %v484, %v541
        %s544 = sld [smem:[#allocation9 + $0x3]]
        %v545 = vstv %s544
        %v546 = vadd.f32 %v542, %v545
        %v547 = vadd.f32 %v543, %v545
        %s548 = sld [smem:[#allocation8 + $0x181]]
        %v549 = vstv %s548
        %v550 = vmul.f32 %v501, %v549
        %v551 = vmul.f32 %v502, %v549
        %v552 = vadd.f32 %v546, %v550
        %v553 = vadd.f32 %v547, %v551
        %s554 = sld [smem:[#allocation8 + $0x182]]
        %v555 = vstv %s554
        %v556 = vmul.f32 %v515, %v555
        %v557 = vmul.f32 %v516, %v555
        %v558 = vadd.f32 %v552, %v556
        %v559 = vadd.f32 %v553, %v557
        %s560 = scalar_lea.vmem %s269, 48 [#allocation11]
        %561 = vst.msk [vmem:[%s560] sm:$0xff] %vm451, %v558
        %562 = vst.msk [vmem:[%s560 + $0x8] sm:$0xff] %vm451, %v559
        %s563 = sld [smem:[#allocation6 + $0x2]]
        %v564 = vld [vmem:[%s349] sm:$0xff]
        %v565 = vld [vmem:[%s349 + $0x8] sm:$0xff]
        %v566 = vstv %s563
        %v567 = vadd.f32 %v564, %v566
        %v568 = vadd.f32 %v565, %v566
        %v569 = vsel %vm385, %v567, %v564
        %v570 = vsel %vm385, %v568, %v565
        %573 = vrot.lane.b32.xlu0 %v567, 126
        %v574 = vpop.permute.xlu0 %573
        %575 = vrot.lane.b32.xlu0 %v568, 126
        %v576 = vpop.permute.xlu0 %575
        %581 = vrot.lane.b32.xlu0 %v564, 126
        %v582 = vpop.permute.xlu0 %581
        %583 = vrot.lane.b32.xlu0 %v565, 126
        %v584 = vpop.permute.xlu0 %583
        %v587 = vsel %vm394, %v574, %v582
        %v588 = vsel %vm394, %v576, %v584
        %589 = vrot.lane.b32.xlu0 %v567, 124
        %v590 = vpop.permute.xlu0 %589
        %591 = vrot.lane.b32.xlu0 %v568, 124
        %v592 = vpop.permute.xlu0 %591
        %595 = vrot.lane.b32.xlu0 %v564, 124
        %v596 = vpop.permute.xlu0 %595
        %597 = vrot.lane.b32.xlu0 %v565, 124
        %v598 = vpop.permute.xlu0 %597
        %v601 = vsel %vm416, %v590, %v596
        %v602 = vsel %vm416, %v592, %v598
        %s603 = sld [smem:[#allocation8 + $0x200]]
        %v604 = vstv %s603
        %v605 = vmul.f32 %v569, %v604
        %v606 = vmul.f32 %v570, %v604
        %s607 = sld [smem:[#allocation9 + $0x4]]
        %v608 = vstv %s607
        %v609 = vadd.f32 %v605, %v608
        %v610 = vadd.f32 %v606, %v608
        %s611 = sld [smem:[#allocation8 + $0x201]]
        %v612 = vstv %s611
        %v613 = vmul.f32 %v587, %v612
        %v614 = vmul.f32 %v588, %v612
        %v615 = vadd.f32 %v609, %v613
        %v616 = vadd.f32 %v610, %v614
        %s617 = sld [smem:[#allocation8 + $0x202]]
        %v618 = vstv %s617
        %v619 = vmul.f32 %v601, %v618
        %v620 = vmul.f32 %v602, %v618
        %v621 = vadd.f32 %v615, %v619
        %v622 = vadd.f32 %v616, %v620
        %s623 = scalar_lea.vmem %s269, 64 [#allocation11]
        %624 = vst.msk [vmem:[%s623] sm:$0xff] %vm451, %v621
        %625 = vst.msk [vmem:[%s623 + $0x8] sm:$0xff] %vm451, %v622
        %s626 = sld [smem:[#allocation8 + $0x280]]
        %v627 = vstv %s626
        %v628 = vmul.f32 %v569, %v627
        %v629 = vmul.f32 %v570, %v627
        %s630 = sld [smem:[#allocation9 + $0x5]]
        %v631 = vstv %s630
        %v632 = vadd.f32 %v628, %v631
        %v633 = vadd.f32 %v629, %v631
        %s634 = sld [smem:[#allocation8 + $0x281]]
        %v635 = vstv %s634
        %v636 = vmul.f32 %v587, %v635
        %v637 = vmul.f32 %v588, %v635
        %v638 = vadd.f32 %v632, %v636
        %v639 = vadd.f32 %v633, %v637
        %s640 = sld [smem:[#allocation8 + $0x282]]
        %v641 = vstv %s640
        %v642 = vmul.f32 %v601, %v641
        %v643 = vmul.f32 %v602, %v641
        %v644 = vadd.f32 %v638, %v642
        %v645 = vadd.f32 %v639, %v643
        %s646 = scalar_lea.vmem %s269, 80 [#allocation11]
        %647 = vst.msk [vmem:[%s646] sm:$0xff] %vm451, %v644
        %648 = vst.msk [vmem:[%s646 + $0x8] sm:$0xff] %vm451, %v645
        %s649 = sld [smem:[#allocation6 + $0x3]]
        %v650 = vld [vmem:[%s375] sm:$0xff]
        %v651 = vld [vmem:[%s375 + $0x8] sm:$0xff]
        %v652 = vstv %s649
        %v653 = vadd.f32 %v650, %v652
        %v654 = vadd.f32 %v651, %v652
        %v655 = vsel %vm385, %v653, %v650
        %v656 = vsel %vm385, %v654, %v651
        %659 = vrot.lane.b32.xlu0 %v653, 126
        %v660 = vpop.permute.xlu0 %659
        %661 = vrot.lane.b32.xlu0 %v654, 126
        %v662 = vpop.permute.xlu0 %661
        %667 = vrot.lane.b32.xlu0 %v650, 126
        %v668 = vpop.permute.xlu0 %667
        %669 = vrot.lane.b32.xlu0 %v651, 126
        %v670 = vpop.permute.xlu0 %669
        %v673 = vsel %vm394, %v660, %v668
        %v674 = vsel %vm394, %v662, %v670
        %675 = vrot.lane.b32.xlu0 %v653, 124
        %v676 = vpop.permute.xlu0 %675
        %677 = vrot.lane.b32.xlu0 %v654, 124
        %v678 = vpop.permute.xlu0 %677
        %681 = vrot.lane.b32.xlu0 %v650, 124
        %v682 = vpop.permute.xlu0 %681
        %683 = vrot.lane.b32.xlu0 %v651, 124
        %v684 = vpop.permute.xlu0 %683
        %v687 = vsel %vm416, %v676, %v682
        %v688 = vsel %vm416, %v678, %v684
        %s689 = sld [smem:[#allocation8 + $0x300]]
        %v690 = vstv %s689
        %v691 = vmul.f32 %v655, %v690
        %v692 = vmul.f32 %v656, %v690
        %s693 = sld [smem:[#allocation9 + $0x6]]
        %v694 = vstv %s693
        %v695 = vadd.f32 %v691, %v694
        %v696 = vadd.f32 %v692, %v694
        %s697 = sld [smem:[#allocation8 + $0x301]]
        %v698 = vstv %s697
        %v699 = vmul.f32 %v673, %v698
        %v700 = vmul.f32 %v674, %v698
        %v701 = vadd.f32 %v695, %v699
        %v702 = vadd.f32 %v696, %v700
        %s703 = sld [smem:[#allocation8 + $0x302]]
        %v704 = vstv %s703
        %v705 = vmul.f32 %v687, %v704
        %v706 = vmul.f32 %v688, %v704
        %v707 = vadd.f32 %v701, %v705
        %v708 = vadd.f32 %v702, %v706
        %s709 = scalar_lea.vmem %s269, 96 [#allocation11]
        %710 = vst.msk [vmem:[%s709] sm:$0xff] %vm451, %v707
        %711 = vst.msk [vmem:[%s709 + $0x8] sm:$0xff] %vm451, %v708
        %s712 = sld [smem:[#allocation8 + $0x380]]
        %v713 = vstv %s712
        %v714 = vmul.f32 %v655, %v713
        %v715 = vmul.f32 %v656, %v713
        %s716 = sld [smem:[#allocation9 + $0x7]]
        %v717 = vstv %s716
        %v718 = vadd.f32 %v714, %v717
        %v719 = vadd.f32 %v715, %v717
        %s720 = sld [smem:[#allocation8 + $0x381]]
        %v721 = vstv %s720
        %v722 = vmul.f32 %v673, %v721
        %v723 = vmul.f32 %v674, %v721
        %v724 = vadd.f32 %v718, %v722
        %v725 = vadd.f32 %v719, %v723
        %s726 = sld [smem:[#allocation8 + $0x382]]
        %v727 = vstv %s726
        %v728 = vmul.f32 %v687, %v727
        %v729 = vmul.f32 %v688, %v727
        %v730 = vadd.f32 %v724, %v728
        %v731 = vadd.f32 %v725, %v729
        %s732 = scalar_lea.vmem %s269, 112 [#allocation11]
        %733 = vst.msk [vmem:[%s732] sm:$0xff] %vm451, %v730
        %734 = vst.msk [vmem:[%s732 + $0x8] sm:$0xff] %vm451, %v731
        %s735 = sand.u32 %s140, 1
        %s736 = scalar_lea.sflag [#allocation4], %s735
        %s737 = sand.u32 %s140, 1
        %s738 = smul.addr %s737, 128
        %s739 = scalar_lea.vmem [#allocation11], %s738
        // Predicated region
        $region57: #{tpu_custom_call.1} parent=39 // pred_check
          %p740 = pneg %p150
        $region58: #{tpu_custom_call.1} parent=39 // pred_check_branch
          %742 = sbr.rel (%p740) target = $region60
        $region59: #{tpu_custom_call.1} parent=39 // pred_region
          %s744 = ssub.s32 2048, 2048
          %745 = vsyncadd %s736, %s744
          %s746 = smul.addr %s22, 16
          %s747 = smul.addr %s746, 128
          %s748 = scalar_lea.hbm %s5, %s747
          %s749 = sshll.u32 %s739, 4
          %s750 = int_to_ptr.vmem [resolvable:$true] %s749
          %755 = dma.vmem_to_hbm [thread:$0]  %s750, 2048, %s748, %s736, 128, 128, 8
        $region60: #{tpu_custom_call.1} parent=39 // pred_fallthru
          _
      $region40: #{tpu_custom_call.1} parent=5 // pred_fallthru
        _
      %p756 = scmp.le.s32.totalorder 2, %s17
      // Predicated region
      $region61: #{tpu_custom_call.1} parent=5 // pred_check
        %p757 = pneg %p756
      $region62: #{tpu_custom_call.1} parent=5 // pred_check_branch
        %759 = sbr.rel (%p757) target = $region64
      $region63: #{tpu_custom_call.1} parent=5 // pred_region
        %s760 = ssub.s32 %s17, 2
        // Predicated region
        $region65: #{tpu_custom_call.1} parent=63 // pred_check
          %p761 = pneg %p156
        $region66: #{tpu_custom_call.1} parent=63 // pred_check_branch
          %763 = sbr.rel (%p761) target = $region68
        $region67: #{tpu_custom_call.1} parent=63 // pred_region
          %s764 = sand.u32 %s141, 1
          %s765 = scalar_lea.sflag [#allocation4], %s764
          %s766 = sand.u32 %s141, 1
          %s767 = smul.addr %s766, 128
          %s768 = scalar_lea.vmem [#allocation11], %s767
          %769 = dma.done %s765, 2048
        $region68: #{tpu_custom_call.1} parent=63 // pred_fallthru
          _
      $region64: #{tpu_custom_call.1} parent=5 // pred_fallthru
        _
    $region6: #{tpu_custom_call.1} parent=1 // loop_footer
      %s21 = sadd.s32 1, %s17
    $region7: #{tpu_custom_call.1} parent=1 // loop_footer_branch
      %16 = sbr.rel target = $region3
    $region8: #{tpu_custom_call.1} parent=1 // loop_exit
      _
    %770 = vsyncpa [#allocation4], 1
    %s771 = scalar_lea.sflag [#allocation4], 1
    %772 = vsyncpa %s771, 1
    %773 = vsyncpa [#allocation5], 1
    %s774 = scalar_lea.sflag [#allocation5], 1
    %775 = vsyncpa %s774, 1
    %776 = vsyncpa [#allocation7], 1
    %777 = vsyncpa [#allocation10], 1

</llo_original>
